<compile_context>
chip_gen: v7x
topology: tpu7x:2x2x1
jax: 0.10.0
libtpu: 0.0.40
codegen_flags: <defaults>
</compile_context>

<pallas_src>
import jax
import jax.numpy as jnp
from jax import lax
from jax.experimental import pallas as pl
from jax.experimental.pallas import tpu as pltpu


# bf16 operands only on a real TPU (MXU-native); f32 elsewhere so the
# interpret/CPU dot runtime (no bf16xbf16=f32 support) still runs clean.
_COMPUTE_DTYPE = jnp.bfloat16 if jax.default_backend() == "tpu" else jnp.float32


# ---------------------------------------------------------------------------
# Fused forward kernel (single pallas_call, everything VMEM-resident)
# ---------------------------------------------------------------------------
def _make_kernel(n_p, n_a, n_c, hidden, cd):
    """Build the fused kernel for static node counts / hidden size."""
    f32 = jnp.float32

    def kernel(x_ref, hinc_ref, a_has_ref, a_pdst_ref,
               w_hg_ref, w_gnn_ref, gp_ref, ga_ref, o_ref):
        # ---- unpack node features (one stacked slab) ----------------------
        xp = x_ref[0:n_p, :]                    # (Np, H)
        xa = x_ref[n_p:n_p + n_a, :]            # (Na, H)
        xc = x_ref[n_p + n_a:n_p + n_a + n_c, :]  # (Nc, H)

        # ---- Hypergraph conv on product nodes ------------------------------
        #   z = x_p + Hinc @ (Hinc^T @ x_p) ;  h_p = relu(z @ W_hg_p)
        # Hinc^T @ x_p expressed as a dim-0 contraction (no transposed copy).
        e_feat = lax.dot_general(hinc_ref[...], xp,
                                 (((0,), (0,)), ((), ())),
                                 preferred_element_type=f32)         # (Ne, H)
        hg_msg = jnp.dot(hinc_ref[...], e_feat.astype(cd),
                         preferred_element_type=f32)                 # (Np, H)
        z_p = xp.astype(f32) + hg_msg                                # residual in f32

        h_p = jnp.maximum(jnp.dot(z_p.astype(cd), w_hg_ref[0],
                                  preferred_element_type=f32), 0.0)
        h_a = jnp.maximum(jnp.dot(xa, w_hg_ref[1],
                                  preferred_element_type=f32), 0.0)
        h_c = jnp.maximum(jnp.dot(xc, w_hg_ref[2],
                                  preferred_element_type=f32), 0.0)

        h_p_c = h_p.astype(cd)
        h_a_c = h_a.astype(cd)
        h_c_c = h_c.astype(cd)

        # ---- Hetero GNN layer, aggr='sum' ----------------------------------
        # Shared-LHS weights were concatenated along N outside the kernel:
        #   w_gnn[0] = [W_has        | W_self_product]   (H, 2H)
        #   w_gnn[1] = [W_rev_has    | W_self_av]        (H, 2H)
        #   w_gnn[2] = [W_rev_belong | 0]                (H, 2H)
        pw = jnp.dot(h_p_c, w_gnn_ref[0], preferred_element_type=f32)  # (Np, 2H)
        aw = jnp.dot(h_a_c, w_gnn_ref[1], preferred_element_type=f32)  # (Na, 2H)
        cw = jnp.dot(h_c_c, w_gnn_ref[2], preferred_element_type=f32)  # (Nc, 2H)

        xw_has = pw[:, :hidden]          # (Np, H) message source for 'av' dst
        self_p = pw[:, hidden:]          # (Np, H)
        xw_rhas = aw[:, :hidden]         # (Na, H) message source for 'product' dst
        self_a = aw[:, hidden:]          # (Na, H)
        xw_rbel = cw[:, :hidden]         # (Nc, H) message source for 'product' dst

        # msg_p fused along K:  [A_rev_has | A_rev_bel] @ [XW_a ; XW_c]
        msg_src_p = jnp.concatenate([xw_rhas, xw_rbel], axis=0).astype(cd)  # (Na+Nc, H)
        msg_p = jnp.dot(a_pdst_ref[...], msg_src_p,
                        preferred_element_type=f32)                         # (Np, H)
        msg_a = jnp.dot(a_has_ref[...], xw_has.astype(cd),
                        preferred_element_type=f32)                         # (Na, H)
        # (category destination output is never consumed by the classifier ->
        #  its branch, weights and adjacency are not even shipped to the kernel)

        out_p = jnp.maximum(msg_p + self_p, 0.0)
        out_a = jnp.maximum(msg_a + self_a, 0.0)

        # ---- Classifier: per-edge dot product (fused gather + reduction) ---
        pe = jnp.dot(gp_ref[...], out_p.astype(cd),
                     preferred_element_type=f32)                     # (E, H)
        ae = jnp.dot(ga_ref[...], out_a.astype(cd),
                     preferred_element_type=f32)                     # (E, H)
        prod = pe * ae                                               # (E, H) f32
        # (8,H) @ (E,H)^T -> (8,E): row-sum over H with E on the lane axis
        # (lane-dense output slab; 8 identical rows keep the sublane dim aligned).
        ones8 = jnp.ones((8, hidden), dtype=f32)
        scores = lax.dot_general(ones8, prod, (((1,), (1,)), ((), ())),
                                 preferred_element_type=f32)         # (8, E)
        o_ref[...] = scores

    return kernel


# ---------------------------------------------------------------------------
# Model: params + forward
# ---------------------------------------------------------------------------
NODE_TYPES = ("product", "av", "category")
# (dst_type, src_type, rel) for each hetero edge type (with reverse edges, as
# to_hetero would add so every node type receives messages).
EDGE_TYPES = (
    ("av", "product", "has"),
    ("product", "av", "rev_has"),
    ("category", "product", "belongs_to"),
    ("product", "category", "rev_belongs_to"),
)


def init_params(key, hidden, num_nodes):
    ks = iter(jax.random.split(key, 32))
    p = {}
    for t in NODE_TYPES:
        p[f"{t}_emb"] = 0.1 * jax.random.normal(next(ks), (num_nodes[t], hidden),
                                                dtype=jnp.float32)
    for t in NODE_TYPES:
        p[f"hg_w_{t}"] = 0.1 * jax.random.normal(next(ks), (hidden, hidden),
                                                 dtype=jnp.float32)
    # TODO(synk): reference GNN depth/architecture unspecified; single SAGE-like layer used.
    for (_dst, _src, rel) in EDGE_TYPES:
        p[f"gnn_w_{rel}"] = 0.1 * jax.random.normal(next(ks), (hidden, hidden),
                                                    dtype=jnp.float32)
    for t in NODE_TYPES:
        p[f"gnn_self_{t}"] = 0.1 * jax.random.normal(next(ks), (hidden, hidden),
                                                     dtype=jnp.float32)
    return p


def _full_spec(x):
    zeros = (0,) * x.ndim
    return pl.BlockSpec(x.shape, lambda i, _z=zeros: _z)


def forward(params, node_ids, adj, hyper_inc, edge_label_index):
    cd = _COMPUTE_DTYPE
    f32 = jnp.float32
    hidden = params["hg_w_product"].shape[0]

    # 1) embedding lookup (nodeID branch) -- gather kept as JAX glue.
    xp = jnp.take(params["product_emb"], node_ids["product"], axis=0)
    xa = jnp.take(params["av_emb"], node_ids["av"], axis=0)
    xc = jnp.take(params["category_emb"], node_ids["category"], axis=0)
    n_p, n_a, n_c = xp.shape[0], xa.shape[0], xc.shape[0]

    # 2) pack operands into few, large DMAs
    x_all = jnp.concatenate([xp, xa, xc], axis=0).astype(cd)             # (Np+Na+Nc, H)
    hinc = hyper_inc.astype(cd)                                          # (Np, Ne)
    a_has = adj["has"].astype(cd)                                        # (Na, Np)
    a_pdst = jnp.concatenate([adj["rev_has"], adj["rev_belongs_to"]],
                             axis=1).astype(cd)                          # (Np, Na+Nc)

    w_hg = jnp.stack([params["hg_w_product"], params["hg_w_av"],
                      params["hg_w_category"]]).astype(cd)               # (3, H, H)
    zeros_hh = jnp.zeros((hidden, hidden), f32)
    w_gnn = jnp.stack([
        jnp.concatenate([params["gnn_w_has"], params["gnn_self_product"]], axis=1),
        jnp.concatenate([params["gnn_w_rev_has"], params["gnn_self_av"]], axis=1),
        jnp.concatenate([params["gnn_w_rev_belongs_to"], zeros_hh], axis=1),
    ]).astype(cd)                                                        # (3, H, 2H)

    # classifier gather matrices (one-hot rows, exact in bf16)
    gp = jax.nn.one_hot(edge_label_index[0], n_p, dtype=cd)              # (E, Np)
    ga = jax.nn.one_hot(edge_label_index[1], n_a, dtype=cd)              # (E, Na)

    e_cnt = edge_label_index.shape[1]
    kernel = _make_kernel(n_p, n_a, n_c, hidden, cd)

    inputs = (x_all, hinc, a_has, a_pdst, w_hg, w_gnn, gp, ga)
    out = pl.pallas_call(
        kernel,
        out_shape=jax.ShapeDtypeStruct((8, e_cnt), jnp.float32),
        grid=(1,),
        in_specs=[_full_spec(x) for x in inputs],
        out_specs=pl.BlockSpec((8, e_cnt), lambda i: (0, 0)),
        compiler_params=pltpu.CompilerParams(
            dimension_semantics=("arbitrary",),
        ),
    )(*inputs)
    return out[0]


# ---------------------------------------------------------------------------
# Driver
# ---------------------------------------------------------------------------
if __name__ == "__main__":
    HIDDEN = 128
    NUM_NODES = {"product": 16, "av": 16, "category": 8}
    N_HYPEREDGES = 8
    N_LABEL_EDGES = 16

    root = jax.random.PRNGKey(0)
    k_par, k_adj, k_hyp, k_lbl = jax.random.split(root, 4)

    params = init_params(k_par, HIDDEN, NUM_NODES)

    node_ids = {t: jnp.arange(NUM_NODES[t], dtype=jnp.int32) for t in NODE_TYPES}

    # dense adjacency per edge type: [N_dst, N_src], random 0/1 entries
    ka1, ka2 = jax.random.split(k_adj)
    a_has = (jax.random.uniform(ka1, (NUM_NODES["av"], NUM_NODES["product"])) < 0.25
             ).astype(jnp.float32)
    a_bel = (jax.random.uniform(ka2, (NUM_NODES["category"], NUM_NODES["product"])) < 0.25
             ).astype(jnp.float32)
    adj = {
        "has": a_has,
        "rev_has": a_has.T,
        "belongs_to": a_bel,
        "rev_belongs_to": a_bel.T,
    }

    # hypergraph incidence for product nodes: [Np, Ne]
    hyper_inc = (jax.random.uniform(k_hyp, (NUM_NODES["product"], N_HYPEREDGES)) < 0.3
                 ).astype(jnp.float32)

    # supervision edges for the classifier
    kl1, kl2 = jax.random.split(k_lbl)
    edge_label_index = jnp.stack([
        jax.random.randint(kl1, (N_LABEL_EDGES,), 0, NUM_NODES["product"]),
        jax.random.randint(kl2, (N_LABEL_EDGES,), 0, NUM_NODES["av"]),
    ]).astype(jnp.int32)

    fwd = jax.jit(forward)
    pred = fwd(params, node_ids, adj, hyper_inc, edge_label_index)
    pred = jax.block_until_ready(pred)
    assert pred.shape == (N_LABEL_EDGES,)
    assert bool(jnp.all(jnp.isfinite(pred)))
    print("KERNEL_OK")
</pallas_src>

<mosaic_0001>
module attributes {stable_mosaic.version = 11 : i64} {
  func.func @kernel(%arg0: i32, %arg1: memref<40x128xf32, #tpu.memory_space<vmem>>, %arg2: memref<16x8xf32, #tpu.memory_space<vmem>>, %arg3: memref<16x16xf32, #tpu.memory_space<vmem>>, %arg4: memref<16x24xf32, #tpu.memory_space<vmem>>, %arg5: memref<3x128x128xf32, #tpu.memory_space<vmem>>, %arg6: memref<3x128x256xf32, #tpu.memory_space<vmem>>, %arg7: memref<16x16xf32, #tpu.memory_space<vmem>>, %arg8: memref<16x16xf32, #tpu.memory_space<vmem>>, %arg9: memref<8x16xf32, #tpu.memory_space<vmem>>) attributes {dimension_semantics = [#tpu.dimension_semantics<arbitrary>], iteration_bounds = array<i64: 1>, scalar_prefetch = 0 : i64, scratch_operands = 0 : i64, tpu.core_type = #tpu.core_type<tc>, window_params = [{pipeline_mode = #tpu.pipeline_mode<synchronous>, transform_indices = @transform_0, window_bounds = array<i64: 40, 128>}, {pipeline_mode = #tpu.pipeline_mode<synchronous>, transform_indices = @transform_1, window_bounds = array<i64: 16, 8>}, {pipeline_mode = #tpu.pipeline_mode<synchronous>, transform_indices = @transform_2, window_bounds = array<i64: 16, 16>}, {pipeline_mode = #tpu.pipeline_mode<synchronous>, transform_indices = @transform_3, window_bounds = array<i64: 16, 24>}, {pipeline_mode = #tpu.pipeline_mode<synchronous>, transform_indices = @transform_4, window_bounds = array<i64: 3, 128, 128>}, {pipeline_mode = #tpu.pipeline_mode<synchronous>, transform_indices = @transform_5, window_bounds = array<i64: 3, 128, 256>}, {pipeline_mode = #tpu.pipeline_mode<synchronous>, transform_indices = @transform_6, window_bounds = array<i64: 16, 16>}, {pipeline_mode = #tpu.pipeline_mode<synchronous>, transform_indices = @transform_7, window_bounds = array<i64: 16, 16>}, {pipeline_mode = #tpu.pipeline_mode<synchronous>, transform_indices = @transform_8, window_bounds = array<i64: 8, 16>}]} {
    %c0 = arith.constant 0 : index
    %c0_0 = arith.constant 0 : index
    %0 = vector.load %arg1[%c0, %c0_0] : memref<40x128xf32, #tpu.memory_space<vmem>>, vector<16x128xf32>
    %c16 = arith.constant 16 : index
    %c0_1 = arith.constant 0 : index
    %1 = vector.load %arg1[%c16, %c0_1] : memref<40x128xf32, #tpu.memory_space<vmem>>, vector<16x128xf32>
    %c32 = arith.constant 32 : index
    %c0_2 = arith.constant 0 : index
    %2 = vector.load %arg1[%c32, %c0_2] : memref<40x128xf32, #tpu.memory_space<vmem>>, vector<8x128xf32>
    %c0_3 = arith.constant 0 : index
    %c0_4 = arith.constant 0 : index
    %3 = vector.load %arg2[%c0_3, %c0_4] : memref<16x8xf32, #tpu.memory_space<vmem>>, vector<16x8xf32>
    %cst = arith.constant dense<0.000000e+00> : vector<8x128xf32>
    %4 = tpu.matmul %3, %0, %cst {dimension_numbers = #tpu.dot_dimension_numbers<[0], [0], [1], [1], [0, 1, 1, 1], [], []>} : vector<16x8xf32>, vector<16x128xf32>, vector<8x128xf32> -> vector<8x128xf32>
    %c0_5 = arith.constant 0 : index
    %c0_6 = arith.constant 0 : index
    %5 = vector.load %arg2[%c0_5, %c0_6] : memref<16x8xf32, #tpu.memory_space<vmem>>, vector<16x8xf32>
    %cst_7 = arith.constant dense<0.000000e+00> : vector<16x128xf32>
    %6 = tpu.matmul %5, %4, %cst_7 {dimension_numbers = #tpu.dot_dimension_numbers<[1], [0], [0], [1], [0, 0, 1, 1], [], []>} : vector<16x8xf32>, vector<8x128xf32>, vector<16x128xf32> -> vector<16x128xf32>
    %7 = arith.addf %0, %6 : vector<16x128xf32>
    %c0_8 = arith.constant 0 : index
    %c0_9 = arith.constant 0 : index
    %c0_10 = arith.constant 0 : index
    %8 = vector.load %arg5[%c0_8, %c0_9, %c0_10] : memref<3x128x128xf32, #tpu.memory_space<vmem>>, vector<1x128x128xf32>
    %9 = vector.shape_cast %8 : vector<1x128x128xf32> to vector<128x128xf32>
    %cst_11 = arith.constant dense<0.000000e+00> : vector<16x128xf32>
    %10 = tpu.matmul %7, %9, %cst_11 {dimension_numbers = #tpu.dot_dimension_numbers<[1], [0], [0], [1], [0, 0, 1, 1], [], []>} : vector<16x128xf32>, vector<128x128xf32>, vector<16x128xf32> -> vector<16x128xf32>
    %cst_12 = arith.constant 0.000000e+00 : f32
    %11 = vector.broadcast %cst_12 : f32 to vector<16x128xf32>
    %12 = arith.maximumf %10, %11 : vector<16x128xf32>
    %c1 = arith.constant 1 : index
    %c0_13 = arith.constant 0 : index
    %c0_14 = arith.constant 0 : index
    %13 = vector.load %arg5[%c1, %c0_13, %c0_14] : memref<3x128x128xf32, #tpu.memory_space<vmem>>, vector<1x128x128xf32>
    %14 = vector.shape_cast %13 : vector<1x128x128xf32> to vector<128x128xf32>
    %cst_15 = arith.constant dense<0.000000e+00> : vector<16x128xf32>
    %15 = tpu.matmul %1, %14, %cst_15 {dimension_numbers = #tpu.dot_dimension_numbers<[1], [0], [0], [1], [0, 0, 1, 1], [], []>} : vector<16x128xf32>, vector<128x128xf32>, vector<16x128xf32> -> vector<16x128xf32>
    %cst_16 = arith.constant 0.000000e+00 : f32
    %16 = vector.broadcast %cst_16 : f32 to vector<16x128xf32>
    %17 = arith.maximumf %15, %16 : vector<16x128xf32>
    %c2 = arith.constant 2 : index
    %c0_17 = arith.constant 0 : index
    %c0_18 = arith.constant 0 : index
    %18 = vector.load %arg5[%c2, %c0_17, %c0_18] : memref<3x128x128xf32, #tpu.memory_space<vmem>>, vector<1x128x128xf32>
    %19 = vector.shape_cast %18 : vector<1x128x128xf32> to vector<128x128xf32>
    %cst_19 = arith.constant dense<0.000000e+00> : vector<8x128xf32>
    %20 = tpu.matmul %2, %19, %cst_19 {dimension_numbers = #tpu.dot_dimension_numbers<[1], [0], [0], [1], [0, 0, 1, 1], [], []>} : vector<8x128xf32>, vector<128x128xf32>, vector<8x128xf32> -> vector<8x128xf32>
    %cst_20 = arith.constant 0.000000e+00 : f32
    %21 = vector.broadcast %cst_20 : f32 to vector<8x128xf32>
    %22 = arith.maximumf %20, %21 : vector<8x128xf32>
    %c0_21 = arith.constant 0 : index
    %c0_22 = arith.constant 0 : index
    %c0_23 = arith.constant 0 : index
    %23 = vector.load %arg6[%c0_21, %c0_22, %c0_23] : memref<3x128x256xf32, #tpu.memory_space<vmem>>, vector<1x128x256xf32>
    %24 = vector.shape_cast %23 : vector<1x128x256xf32> to vector<128x256xf32>
    %cst_24 = arith.constant dense<0.000000e+00> : vector<16x256xf32>
    %25 = tpu.matmul %12, %24, %cst_24 {dimension_numbers = #tpu.dot_dimension_numbers<[1], [0], [0], [1], [0, 0, 1, 1], [], []>} : vector<16x128xf32>, vector<128x256xf32>, vector<16x256xf32> -> vector<16x256xf32>
    %c1_25 = arith.constant 1 : index
    %c0_26 = arith.constant 0 : index
    %c0_27 = arith.constant 0 : index
    %26 = vector.load %arg6[%c1_25, %c0_26, %c0_27] : memref<3x128x256xf32, #tpu.memory_space<vmem>>, vector<1x128x256xf32>
    %27 = vector.shape_cast %26 : vector<1x128x256xf32> to vector<128x256xf32>
    %cst_28 = arith.constant dense<0.000000e+00> : vector<16x256xf32>
    %28 = tpu.matmul %17, %27, %cst_28 {dimension_numbers = #tpu.dot_dimension_numbers<[1], [0], [0], [1], [0, 0, 1, 1], [], []>} : vector<16x128xf32>, vector<128x256xf32>, vector<16x256xf32> -> vector<16x256xf32>
    %c2_29 = arith.constant 2 : index
    %c0_30 = arith.constant 0 : index
    %c0_31 = arith.constant 0 : index
    %29 = vector.load %arg6[%c2_29, %c0_30, %c0_31] : memref<3x128x256xf32, #tpu.memory_space<vmem>>, vector<1x128x256xf32>
    %30 = vector.shape_cast %29 : vector<1x128x256xf32> to vector<128x256xf32>
    %cst_32 = arith.constant dense<0.000000e+00> : vector<8x256xf32>
    %31 = tpu.matmul %22, %30, %cst_32 {dimension_numbers = #tpu.dot_dimension_numbers<[1], [0], [0], [1], [0, 0, 1, 1], [], []>} : vector<8x128xf32>, vector<128x256xf32>, vector<8x256xf32> -> vector<8x256xf32>
    %32 = vector.extract_strided_slice %25 {offsets = [0, 0], sizes = [16, 128], strides = [1, 1]} : vector<16x256xf32> to vector<16x128xf32>
    %33 = vector.extract_strided_slice %25 {offsets = [0, 128], sizes = [16, 128], strides = [1, 1]} : vector<16x256xf32> to vector<16x128xf32>
    %34 = vector.extract_strided_slice %28 {offsets = [0, 0], sizes = [16, 128], strides = [1, 1]} : vector<16x256xf32> to vector<16x128xf32>
    %35 = vector.extract_strided_slice %28 {offsets = [0, 128], sizes = [16, 128], strides = [1, 1]} : vector<16x256xf32> to vector<16x128xf32>
    %36 = vector.extract_strided_slice %31 {offsets = [0, 0], sizes = [8, 128], strides = [1, 1]} : vector<8x256xf32> to vector<8x128xf32>
    %37 = tpu.concatenate %34, %36 in 0 : vector<16x128xf32>, vector<8x128xf32> -> vector<24x128xf32>
    %c0_33 = arith.constant 0 : index
    %c0_34 = arith.constant 0 : index
    %38 = vector.load %arg4[%c0_33, %c0_34] : memref<16x24xf32, #tpu.memory_space<vmem>>, vector<16x24xf32>
    %cst_35 = arith.constant dense<0.000000e+00> : vector<16x128xf32>
    %39 = tpu.matmul %38, %37, %cst_35 {dimension_numbers = #tpu.dot_dimension_numbers<[1], [0], [0], [1], [0, 0, 1, 1], [], []>} : vector<16x24xf32>, vector<24x128xf32>, vector<16x128xf32> -> vector<16x128xf32>
    %c0_36 = arith.constant 0 : index
    %c0_37 = arith.constant 0 : index
    %40 = vector.load %arg3[%c0_36, %c0_37] : memref<16x16xf32, #tpu.memory_space<vmem>>, vector<16x16xf32>
    %cst_38 = arith.constant dense<0.000000e+00> : vector<16x128xf32>
    %41 = tpu.matmul %40, %32, %cst_38 {dimension_numbers = #tpu.dot_dimension_numbers<[1], [0], [0], [1], [0, 0, 1, 1], [], []>} : vector<16x16xf32>, vector<16x128xf32>, vector<16x128xf32> -> vector<16x128xf32>
    %42 = arith.addf %39, %33 : vector<16x128xf32>
    %cst_39 = arith.constant 0.000000e+00 : f32
    %43 = vector.broadcast %cst_39 : f32 to vector<16x128xf32>
    %44 = arith.maximumf %42, %43 : vector<16x128xf32>
    %45 = arith.addf %41, %35 : vector<16x128xf32>
    %cst_40 = arith.constant 0.000000e+00 : f32
    %46 = vector.broadcast %cst_40 : f32 to vector<16x128xf32>
    %47 = arith.maximumf %45, %46 : vector<16x128xf32>
    %c0_41 = arith.constant 0 : index
    %c0_42 = arith.constant 0 : index
    %48 = vector.load %arg7[%c0_41, %c0_42] : memref<16x16xf32, #tpu.memory_space<vmem>>, vector<16x16xf32>
    %cst_43 = arith.constant dense<0.000000e+00> : vector<16x128xf32>
    %49 = tpu.matmul %48, %44, %cst_43 {dimension_numbers = #tpu.dot_dimension_numbers<[1], [0], [0], [1], [0, 0, 1, 1], [], []>} : vector<16x16xf32>, vector<16x128xf32>, vector<16x128xf32> -> vector<16x128xf32>
    %c0_44 = arith.constant 0 : index
    %c0_45 = arith.constant 0 : index
    %50 = vector.load %arg8[%c0_44, %c0_45] : memref<16x16xf32, #tpu.memory_space<vmem>>, vector<16x16xf32>
    %cst_46 = arith.constant dense<0.000000e+00> : vector<16x128xf32>
    %51 = tpu.matmul %50, %47, %cst_46 {dimension_numbers = #tpu.dot_dimension_numbers<[1], [0], [0], [1], [0, 0, 1, 1], [], []>} : vector<16x16xf32>, vector<16x128xf32>, vector<16x128xf32> -> vector<16x128xf32>
    %52 = arith.mulf %49, %51 : vector<16x128xf32>
    %cst_47 = arith.constant 1.000000e+00 : f32
    %53 = vector.broadcast %cst_47 : f32 to vector<8x128xf32>
    %cst_48 = arith.constant dense<0.000000e+00> : vector<8x16xf32>
    %54 = tpu.matmul %53, %52, %cst_48 {dimension_numbers = #tpu.dot_dimension_numbers<[1], [1], [0], [0], [0, 0, 1, 0], [], []>} : vector<8x128xf32>, vector<16x128xf32>, vector<8x16xf32> -> vector<8x16xf32>
    %c0_49 = arith.constant 0 : index
    %c0_50 = arith.constant 0 : index
    %55 = vector.load %arg9[%c0_49, %c0_50] : memref<8x16xf32, #tpu.memory_space<vmem>>, vector<8x16xf32>
    tpu.vector_store %arg9[%c0_49, %c0_50], %54 {strides = array<i32>} : memref<8x16xf32, #tpu.memory_space<vmem>>, vector<8x16xf32>,
    return
  }
  func.func @transform_0(%arg0: i32) -> (i32, i32) {
    %c0_i32 = arith.constant 0 : i32
    %c0_i32_0 = arith.constant 0 : i32
    %c0_i32_1 = arith.constant 0 : i32
    return %c0_i32, %c0_i32_0 : i32, i32
  }
  func.func @transform_1(%arg0: i32) -> (i32, i32) {
    %c0_i32 = arith.constant 0 : i32
    %c0_i32_0 = arith.constant 0 : i32
    %c0_i32_1 = arith.constant 0 : i32
    return %c0_i32, %c0_i32_0 : i32, i32
  }
  func.func @transform_2(%arg0: i32) -> (i32, i32) {
    %c0_i32 = arith.constant 0 : i32
    %c0_i32_0 = arith.constant 0 : i32
    %c0_i32_1 = arith.constant 0 : i32
    return %c0_i32, %c0_i32_0 : i32, i32
  }
  func.func @transform_3(%arg0: i32) -> (i32, i32) {
    %c0_i32 = arith.constant 0 : i32
    %c0_i32_0 = arith.constant 0 : i32
    %c0_i32_1 = arith.constant 0 : i32
    return %c0_i32, %c0_i32_0 : i32, i32
  }
  func.func @transform_4(%arg0: i32) -> (i32, i32, i32) {
    %c0_i32 = arith.constant 0 : i32
    %c0_i32_0 = arith.constant 0 : i32
    %c0_i32_1 = arith.constant 0 : i32
    %c0_i32_2 = arith.constant 0 : i32
    return %c0_i32, %c0_i32_0, %c0_i32_1 : i32, i32, i32
  }
  func.func @transform_5(%arg0: i32) -> (i32, i32, i32) {
    %c0_i32 = arith.constant 0 : i32
    %c0_i32_0 = arith.constant 0 : i32
    %c0_i32_1 = arith.constant 0 : i32
    %c0_i32_2 = arith.constant 0 : i32
    return %c0_i32, %c0_i32_0, %c0_i32_1 : i32, i32, i32
  }
  func.func @transform_6(%arg0: i32) -> (i32, i32) {
    %c0_i32 = arith.constant 0 : i32
    %c0_i32_0 = arith.constant 0 : i32
    %c0_i32_1 = arith.constant 0 : i32
    return %c0_i32, %c0_i32_0 : i32, i32
  }
  func.func @transform_7(%arg0: i32) -> (i32, i32) {
    %c0_i32 = arith.constant 0 : i32
    %c0_i32_0 = arith.constant 0 : i32
    %c0_i32_1 = arith.constant 0 : i32
    return %c0_i32, %c0_i32_0 : i32, i32
  }
  func.func @transform_8(%arg0: i32) -> (i32, i32) {
    %c0_i32 = arith.constant 0 : i32
    %c0_i32_0 = arith.constant 0 : i32
    %c0_i32_1 = arith.constant 0 : i32
    return %c0_i32, %c0_i32_0 : i32, i32
  }
}

</mosaic_0001>

<llo_original>
// kernel: forward.1
$region0: #{forward.1}
  #allocation0 [shape = 'u32[]', space=smem, size = 0x4, offset = 0x4, fixed_abs, tag = 'smem constant byte address 0x4 - core index']
  #allocation1 [shape = 'u32[144,128]{1,0:T(1,128)}', space=vmem, size = 0x12000, scoped, tag = 'internal scratch']
  %s0 = inlined_call_operand.vmem [shape: f32[40,128], index: 0, kind: input, shape index: {}]
  %s1 = inlined_call_operand.vmem [shape: f32[16,8], index: 1, kind: input, shape index: {}]
  %s2 = inlined_call_operand.vmem [shape: f32[16,16], index: 2, kind: input, shape index: {}]
  %s3 = inlined_call_operand.vmem [shape: f32[16,24], index: 3, kind: input, shape index: {}]
  %s4 = inlined_call_operand.vmem [shape: f32[3,128,128], index: 4, kind: input, shape index: {}]
  %s5 = inlined_call_operand.vmem [shape: f32[3,128,256], index: 5, kind: input, shape index: {}]
  %s6 = inlined_call_operand.vmem [shape: f32[16,16], index: 6, kind: input, shape index: {}]
  %s7 = inlined_call_operand.vmem [shape: f32[16,16], index: 7, kind: input, shape index: {}]
  %s8 = inlined_call_operand.vmem [shape: f32[8,16], index: 8, kind: output, shape index: {}]
  %s9 = sld [smem:[#allocation0]]
  $region42: #{forward.1} parent=0
    _
  %s11 = ssub.s32 1, %s9
  %s12 = scalar_select 0, %s11, %s9
  // Predicated region
  $region2: #{forward.1} parent=0 // pred_check
    _
  $region3: #{forward.1} parent=0 // pred_check_branch
    %14 = sbr.rel (0) target = $region5
  $region4: #{forward.1} parent=0 // pred_region
    _
  $region5: #{forward.1} parent=0 // pred_fallthru
    _
  // Predicated region
  $region6: #{forward.1} parent=0 // pred_check
    _
  $region7: #{forward.1} parent=0 // pred_check_branch
    %16 = sbr.rel (0) target = $region9
  $region8: #{forward.1} parent=0 // pred_region
    _
  $region9: #{forward.1} parent=0 // pred_fallthru
    _
  // Predicated region
  $region10: #{forward.1} parent=0 // pred_check
    _
  $region11: #{forward.1} parent=0 // pred_check_branch
    %18 = sbr.rel (0) target = $region13
  $region12: #{forward.1} parent=0 // pred_region
    _
  $region13: #{forward.1} parent=0 // pred_fallthru
    _
  // Predicated region
  $region14: #{forward.1} parent=0 // pred_check
    _
  $region15: #{forward.1} parent=0 // pred_check_branch
    %20 = sbr.rel (0) target = $region17
  $region16: #{forward.1} parent=0 // pred_region
    _
  $region17: #{forward.1} parent=0 // pred_fallthru
    _
  // Predicated region
  $region18: #{forward.1} parent=0 // pred_check
    _
  $region19: #{forward.1} parent=0 // pred_check_branch
    %22 = sbr.rel (0) target = $region21
  $region20: #{forward.1} parent=0 // pred_region
    _
  $region21: #{forward.1} parent=0 // pred_fallthru
    _
  // Predicated region
  $region22: #{forward.1} parent=0 // pred_check
    _
  $region23: #{forward.1} parent=0 // pred_check_branch
    %24 = sbr.rel (0) target = $region25
  $region24: #{forward.1} parent=0 // pred_region
    _
  $region25: #{forward.1} parent=0 // pred_fallthru
    _
  // Predicated region
  $region26: #{forward.1} parent=0 // pred_check
    _
  $region27: #{forward.1} parent=0 // pred_check_branch
    %26 = sbr.rel (0) target = $region29
  $region28: #{forward.1} parent=0 // pred_region
    _
  $region29: #{forward.1} parent=0 // pred_fallthru
    _
  // Predicated region
  $region30: #{forward.1} parent=0 // pred_check
    _
  $region31: #{forward.1} parent=0 // pred_check_branch
    %28 = sbr.rel (0) target = $region33
  $region32: #{forward.1} parent=0 // pred_region
    _
  $region33: #{forward.1} parent=0 // pred_fallthru
    _
  %v29 = vld [vmem:[%s0] sm:$0xff]
  %v30 = vld [vmem:[%s0 + $0x8] sm:$0xff]
  %v31 = vld [vmem:[%s0 + $0x10] sm:$0xff]
  %v32 = vld [vmem:[%s0 + $0x18] sm:$0xff]
  %v33 = vld [vmem:[%s0 + $0x20] sm:$0xff]
  %v34 = vld [vmem:[%s1] sm:$0xff]
  %v35 = vld [vmem:[%s1 + $0x8] sm:$0xff]
  %36 = vxpose.xlu0.b32.start [1/16] %v34, 128
  %37 = vxpose.xlu0.b32.cont [2/16] %v35, 128
  %38 = vxpose.xlu0.b32.cont [3/16] 0.0, 128
  %39 = vxpose.xlu0.b32.cont [4/16] 0.0, 128
  %40 = vxpose.xlu0.b32.cont [5/16] 0.0, 128
  %41 = vxpose.xlu0.b32.cont [6/16] 0.0, 128
  %42 = vxpose.xlu0.b32.cont [7/16] 0.0, 128
  %43 = vxpose.xlu0.b32.cont [8/16] 0.0, 128
  %44 = vxpose.xlu0.b32.cont [9/16] 0.0, 128
  %45 = vxpose.xlu0.b32.cont [10/16] 0.0, 128
  %46 = vxpose.xlu0.b32.cont [11/16] 0.0, 128
  %47 = vxpose.xlu0.b32.cont [12/16] 0.0, 128
  %48 = vxpose.xlu0.b32.cont [13/16] 0.0, 128
  %49 = vxpose.xlu0.b32.cont [14/16] 0.0, 128
  %50 = vxpose.xlu0.b32.cont [15/16] 0.0, 128
  %51 = vxpose.xlu0.b32.end [16/16] 0.0, 128
  %v52 = vpop.trf.xlu0
  %v53 = vpop.trf.xlu0
  %v54 = vpop.trf.xlu0
  %v55 = vpop.trf.xlu0
  %v56 = vpop.trf.xlu0
  %v57 = vpop.trf.xlu0
  %v58 = vpop.trf.xlu0
  %v59 = vpop.trf.xlu0
  %v60 = vpop.trf.xlu0
  %v61 = vpop.trf.xlu0
  %v62 = vpop.trf.xlu0
  %v63 = vpop.trf.xlu0
  %v64 = vpop.trf.xlu0
  %v65 = vpop.trf.xlu0
  %v66 = vpop.trf.xlu0
  %v67 = vpop.trf.xlu0
  %vm68 = vcmask 130048
  %v70 = vsel %vm68, %v52, 0
  %72 = vmatprep.subr.mxu0 0.0
  %73 = vmatpush1.msra.mxu0 %v29
  %74 = vmatprep.subr.mxu0 0.0
  %75 = vmatpush1.msra.mxu0 %v30
  %76 = vmatprep.subr.mxu0 0.0
  %77 = vmatpush1.msra.mxu0 0.0
  %78 = vmatprep.subr.mxu0 0.0
  %79 = vmatpush1.msra.mxu0 0.0
  %80 = vmatprep.subr.mxu0 0.0
  %81 = vmatpush1.msra.mxu0 0.0
  %82 = vmatprep.subr.mxu0 0.0
  %83 = vmatpush1.msra.mxu0 0.0
  %84 = vmatprep.subr.mxu0 0.0
  %85 = vmatpush1.msra.mxu0 0.0
  %86 = vmatprep.subr.mxu0 0.0
  %87 = vmatpush1.msra.mxu0 0.0
  %88 = vmatprep.subr.mxu0 0.0
  %89 = vmatpush1.msra.mxu0 0.0
  %90 = vmatprep.subr.mxu0 0.0
  %91 = vmatpush1.msra.mxu0 0.0
  %92 = vmatprep.subr.mxu0 0.0
  %93 = vmatpush1.msra.mxu0 0.0
  %94 = vmatprep.subr.mxu0 0.0
  %95 = vmatpush1.msra.mxu0 0.0
  %96 = vmatprep.subr.mxu0 0.0
  %97 = vmatpush1.msra.mxu0 0.0
  %98 = vmatprep.subr.mxu0 0.0
  %99 = vmatpush1.msra.mxu0 0.0
  %100 = vmatprep.subr.mxu0 0.0
  %101 = vmatpush1.msra.mxu0 0.0
  %102 = vmatprep.subr.mxu0 0.0
  %103 = vmatpush1.msra.mxu0 0.0
  %104 = vmatprep.subr.mxu0 0.0
  %105 = vmatpush1.msra.mxu0 0.0
  %106 = vmatprep.subr.mxu0 0.0
  %107 = vmatpush1.msra.mxu0 0.0
  %108 = vmatprep.subr.mxu0 0.0
  %109 = vmatpush1.msra.mxu0 0.0
  %110 = vmatprep.subr.mxu0 0.0
  %111 = vmatpush1.msra.mxu0 0.0
  %112 = vmatprep.subr.mxu0 0.0
  %113 = vmatpush1.msra.mxu0 0.0
  %114 = vmatprep.subr.mxu0 0.0
  %115 = vmatpush1.msra.mxu0 0.0
  %116 = vmatprep.subr.mxu0 0.0
  %117 = vmatpush1.msra.mxu0 0.0
  %118 = vmatprep.subr.mxu0 0.0
  %119 = vmatpush1.msra.mxu0 0.0
  %120 = vmatprep.subr.mxu0 0.0
  %121 = vmatpush1.msra.mxu0 0.0
  %122 = vmatprep.subr.mxu0 0.0
  %123 = vmatpush1.msra.mxu0 0.0
  %124 = vmatprep.subr.mxu0 0.0
  %125 = vmatpush1.msra.mxu0 0.0
  %126 = vmatprep.subr.mxu0 0.0
  %127 = vmatpush1.msra.mxu0 0.0
  %128 = vmatprep.subr.mxu0 0.0
  %129 = vmatpush1.msra.mxu0 0.0
  %130 = vmatprep.subr.mxu0 0.0
  %131 = vmatpush1.msra.mxu0 0.0
  %132 = vmatprep.subr.mxu0 0.0
  %133 = vmatpush1.msra.mxu0 0.0
  %134 = vmatprep.subr.mxu0 0.0
  %135 = vmatpush1.msra.mxu0 0.0
  %136 = vmatprep.mubr.f32.mxu0 0.0
  %137 = vmatmul.mubr.f32.gmra.mrb[0].mxu0 %v70
  %v138 = vpop.f32.mrb[0].mxu0
  %v139 = vadd.f32 0.0, %v138
  %v140 = vpop.f32.mrb[0].mxu0
  %141 = vdwg.mxu0
  %vm142 = vcmask 64512
  %v144 = vsel %vm142, %v34, 0
  %v147 = vsel %vm142, %v35, 0
  %149 = vmatprep.subr.mxu0 0.0
  %150 = vmatpush1.msra.mxu0 %v139
  %151 = vmatprep.subr.mxu0 0.0
  %152 = vmatpush1.msra.mxu0 0.0
  %153 = vmatprep.subr.mxu0 0.0
  %154 = vmatpush1.msra.mxu0 0.0
  %155 = vmatprep.subr.mxu0 0.0
  %156 = vmatpush1.msra.mxu0 0.0
  %157 = vmatprep.subr.mxu0 0.0
  %158 = vmatpush1.msra.mxu0 0.0
  %159 = vmatprep.subr.mxu0 0.0
  %160 = vmatpush1.msra.mxu0 0.0
  %161 = vmatprep.subr.mxu0 0.0
  %162 = vmatpush1.msra.mxu0 0.0
  %163 = vmatprep.subr.mxu0 0.0
  %164 = vmatpush1.msra.mxu0 0.0
  %165 = vmatprep.subr.mxu0 0.0
  %166 = vmatpush1.msra.mxu0 0.0
  %167 = vmatprep.subr.mxu0 0.0
  %168 = vmatpush1.msra.mxu0 0.0
  %169 = vmatprep.subr.mxu0 0.0
  %170 = vmatpush1.msra.mxu0 0.0
  %171 = vmatprep.subr.mxu0 0.0
  %172 = vmatpush1.msra.mxu0 0.0
  %173 = vmatprep.subr.mxu0 0.0
  %174 = vmatpush1.msra.mxu0 0.0
  %175 = vmatprep.subr.mxu0 0.0
  %176 = vmatpush1.msra.mxu0 0.0
  %177 = vmatprep.subr.mxu0 0.0
  %178 = vmatpush1.msra.mxu0 0.0
  %179 = vmatprep.subr.mxu0 0.0
  %180 = vmatpush1.msra.mxu0 0.0
  %181 = vmatprep.subr.mxu0 0.0
  %182 = vmatpush1.msra.mxu0 0.0
  %183 = vmatprep.subr.mxu0 0.0
  %184 = vmatpush1.msra.mxu0 0.0
  %185 = vmatprep.subr.mxu0 0.0
  %186 = vmatpush1.msra.mxu0 0.0
  %187 = vmatprep.subr.mxu0 0.0
  %188 = vmatpush1.msra.mxu0 0.0
  %189 = vmatprep.subr.mxu0 0.0
  %190 = vmatpush1.msra.mxu0 0.0
  %191 = vmatprep.subr.mxu0 0.0
  %192 = vmatpush1.msra.mxu0 0.0
  %193 = vmatprep.subr.mxu0 0.0
  %194 = vmatpush1.msra.mxu0 0.0
  %195 = vmatprep.subr.mxu0 0.0
  %196 = vmatpush1.msra.mxu0 0.0
  %197 = vmatprep.subr.mxu0 0.0
  %198 = vmatpush1.msra.mxu0 0.0
  %199 = vmatprep.subr.mxu0 0.0
  %200 = vmatpush1.msra.mxu0 0.0
  %201 = vmatprep.subr.mxu0 0.0
  %202 = vmatpush1.msra.mxu0 0.0
  %203 = vmatprep.subr.mxu0 0.0
  %204 = vmatpush1.msra.mxu0 0.0
  %205 = vmatprep.subr.mxu0 0.0
  %206 = vmatpush1.msra.mxu0 0.0
  %207 = vmatprep.subr.mxu0 0.0
  %208 = vmatpush1.msra.mxu0 0.0
  %209 = vmatprep.subr.mxu0 0.0
  %210 = vmatpush1.msra.mxu0 0.0
  %211 = vmatprep.subr.mxu0 0.0
  %212 = vmatpush1.msra.mxu0 0.0
  %213 = vmatprep.mubr.f32.mxu0 0.0
  %214 = vmatmul.mubr.f32.gmra.mrb[0].mxu0 %v144
  %v215 = vpop.f32.mrb[0].mxu0
  %v216 = vadd.f32 0.0, %v215
  %v217 = vpop.f32.mrb[0].mxu0
  %218 = vmatprep.mubr.f32.mxu0 0.0
  %219 = vmatmul.mubr.f32.gmra.mrb[0].mxu0 %v147
  %v220 = vpop.f32.mrb[0].mxu0
  %v221 = vadd.f32 0.0, %v220
  %v222 = vpop.f32.mrb[0].mxu0
  %223 = vdwg.mxu0
  %v224 = vadd.f32 %v29, %v216
  %v225 = vadd.f32 %v30, %v221
  %v226 = vld [vmem:[%s4] sm:$0xff]
  %v227 = vld [vmem:[%s4 + $0x8] sm:$0xff]
  %v228 = vld [vmem:[%s4 + $0x10] sm:$0xff]
  %v229 = vld [vmem:[%s4 + $0x18] sm:$0xff]
  %v230 = vld [vmem:[%s4 + $0x20] sm:$0xff]
  %v231 = vld [vmem:[%s4 + $0x28] sm:$0xff]
  %v232 = vld [vmem:[%s4 + $0x30] sm:$0xff]
  %v233 = vld [vmem:[%s4 + $0x38] sm:$0xff]
  %v234 = vld [vmem:[%s4 + $0x40] sm:$0xff]
  %v235 = vld [vmem:[%s4 + $0x48] sm:$0xff]
  %v236 = vld [vmem:[%s4 + $0x50] sm:$0xff]
  %v237 = vld [vmem:[%s4 + $0x58] sm:$0xff]
  %v238 = vld [vmem:[%s4 + $0x60] sm:$0xff]
  %v239 = vld [vmem:[%s4 + $0x68] sm:$0xff]
  %v240 = vld [vmem:[%s4 + $0x70] sm:$0xff]
  %v241 = vld [vmem:[%s4 + $0x78] sm:$0xff]
  %242 = vmatprep.subr.mxu0 0.0
  %243 = vmatpush1.msra.mxu0 %v226
  %244 = vmatprep.subr.mxu0 0.0
  %245 = vmatpush1.msra.mxu0 %v227
  %246 = vmatprep.subr.mxu0 0.0
  %247 = vmatpush1.msra.mxu0 %v228
  %248 = vmatprep.subr.mxu0 0.0
  %249 = vmatpush1.msra.mxu0 %v229
  %250 = vmatprep.subr.mxu0 0.0
  %251 = vmatpush1.msra.mxu0 %v230
  %252 = vmatprep.subr.mxu0 0.0
  %253 = vmatpush1.msra.mxu0 %v231
  %254 = vmatprep.subr.mxu0 0.0
  %255 = vmatpush1.msra.mxu0 %v232
  %256 = vmatprep.subr.mxu0 0.0
  %257 = vmatpush1.msra.mxu0 %v233
  %258 = vmatprep.subr.mxu0 0.0
  %259 = vmatpush1.msra.mxu0 %v234
  %260 = vmatprep.subr.mxu0 0.0
  %261 = vmatpush1.msra.mxu0 %v235
  %262 = vmatprep.subr.mxu0 0.0
  %263 = vmatpush1.msra.mxu0 %v236
  %264 = vmatprep.subr.mxu0 0.0
  %265 = vmatpush1.msra.mxu0 %v237
  %266 = vmatprep.subr.mxu0 0.0
  %267 = vmatpush1.msra.mxu0 %v238
  %268 = vmatprep.subr.mxu0 0.0
  %269 = vmatpush1.msra.mxu0 %v239
  %270 = vmatprep.subr.mxu0 0.0
  %271 = vmatpush1.msra.mxu0 %v240
  %272 = vmatprep.subr.mxu0 0.0
  %273 = vmatpush1.msra.mxu0 %v241
  %274 = vmatprep.subr.mxu0 0.0
  %275 = vmatpush1.msra.mxu0 0.0
  %276 = vmatprep.subr.mxu0 0.0
  %277 = vmatpush1.msra.mxu0 0.0
  %278 = vmatprep.subr.mxu0 0.0
  %279 = vmatpush1.msra.mxu0 0.0
  %280 = vmatprep.subr.mxu0 0.0
  %281 = vmatpush1.msra.mxu0 0.0
  %282 = vmatprep.subr.mxu0 0.0
  %283 = vmatpush1.msra.mxu0 0.0
  %284 = vmatprep.subr.mxu0 0.0
  %285 = vmatpush1.msra.mxu0 0.0
  %286 = vmatprep.subr.mxu0 0.0
  %287 = vmatpush1.msra.mxu0 0.0
  %288 = vmatprep.subr.mxu0 0.0
  %289 = vmatpush1.msra.mxu0 0.0
  %290 = vmatprep.subr.mxu0 0.0
  %291 = vmatpush1.msra.mxu0 0.0
  %292 = vmatprep.subr.mxu0 0.0
  %293 = vmatpush1.msra.mxu0 0.0
  %294 = vmatprep.subr.mxu0 0.0
  %295 = vmatpush1.msra.mxu0 0.0
  %296 = vmatprep.subr.mxu0 0.0
  %297 = vmatpush1.msra.mxu0 0.0
  %298 = vmatprep.subr.mxu0 0.0
  %299 = vmatpush1.msra.mxu0 0.0
  %300 = vmatprep.subr.mxu0 0.0
  %301 = vmatpush1.msra.mxu0 0.0
  %302 = vmatprep.subr.mxu0 0.0
  %303 = vmatpush1.msra.mxu0 0.0
  %304 = vmatprep.subr.mxu0 0.0
  %305 = vmatpush1.msra.mxu0 0.0
  %306 = vmatprep.mubr.f32.mxu0 0.0
  %307 = vmatmul.mubr.f32.gmra.mrb[0].mxu0 %v224
  %v308 = vpop.f32.mrb[0].mxu0
  %v309 = vadd.f32 0.0, %v308
  %v310 = vpop.f32.mrb[0].mxu0
  %311 = vmatprep.mubr.f32.mxu0 0.0
  %312 = vmatmul.mubr.f32.gmra.mrb[0].mxu0 %v225
  %v313 = vpop.f32.mrb[0].mxu0
  %v314 = vadd.f32 0.0, %v313
  %v315 = vpop.f32.mrb[0].mxu0
  %316 = vdwg.mxu0
  %v317 = vmax.f32 %v309, 0.0
  %v318 = vmax.f32 %v314, 0.0
  %s319 = scalar_lea.vmem %s4, 128
  %v320 = vld [vmem:[%s319] sm:$0xff]
  %v321 = vld [vmem:[%s319 + $0x8] sm:$0xff]
  %v322 = vld [vmem:[%s319 + $0x10] sm:$0xff]
  %v323 = vld [vmem:[%s319 + $0x18] sm:$0xff]
  %v324 = vld [vmem:[%s319 + $0x20] sm:$0xff]
  %v325 = vld [vmem:[%s319 + $0x28] sm:$0xff]
  %v326 = vld [vmem:[%s319 + $0x30] sm:$0xff]
  %v327 = vld [vmem:[%s319 + $0x38] sm:$0xff]
  %v328 = vld [vmem:[%s319 + $0x40] sm:$0xff]
  %v329 = vld [vmem:[%s319 + $0x48] sm:$0xff]
  %v330 = vld [vmem:[%s319 + $0x50] sm:$0xff]
  %v331 = vld [vmem:[%s319 + $0x58] sm:$0xff]
  %v332 = vld [vmem:[%s319 + $0x60] sm:$0xff]
  %v333 = vld [vmem:[%s319 + $0x68] sm:$0xff]
  %v334 = vld [vmem:[%s319 + $0x70] sm:$0xff]
  %v335 = vld [vmem:[%s319 + $0x78] sm:$0xff]
  %336 = vmatprep.subr.mxu0 0.0
  %337 = vmatpush1.msra.mxu0 %v320
  %338 = vmatprep.subr.mxu0 0.0
  %339 = vmatpush1.msra.mxu0 %v321
  %340 = vmatprep.subr.mxu0 0.0
  %341 = vmatpush1.msra.mxu0 %v322
  %342 = vmatprep.subr.mxu0 0.0
  %343 = vmatpush1.msra.mxu0 %v323
  %344 = vmatprep.subr.mxu0 0.0
  %345 = vmatpush1.msra.mxu0 %v324
  %346 = vmatprep.subr.mxu0 0.0
  %347 = vmatpush1.msra.mxu0 %v325
  %348 = vmatprep.subr.mxu0 0.0
  %349 = vmatpush1.msra.mxu0 %v326
  %350 = vmatprep.subr.mxu0 0.0
  %351 = vmatpush1.msra.mxu0 %v327
  %352 = vmatprep.subr.mxu0 0.0
  %353 = vmatpush1.msra.mxu0 %v328
  %354 = vmatprep.subr.mxu0 0.0
  %355 = vmatpush1.msra.mxu0 %v329
  %356 = vmatprep.subr.mxu0 0.0
  %357 = vmatpush1.msra.mxu0 %v330
  %358 = vmatprep.subr.mxu0 0.0
  %359 = vmatpush1.msra.mxu0 %v331
  %360 = vmatprep.subr.mxu0 0.0
  %361 = vmatpush1.msra.mxu0 %v332
  %362 = vmatprep.subr.mxu0 0.0
  %363 = vmatpush1.msra.mxu0 %v333
  %364 = vmatprep.subr.mxu0 0.0
  %365 = vmatpush1.msra.mxu0 %v334
  %366 = vmatprep.subr.mxu0 0.0
  %367 = vmatpush1.msra.mxu0 %v335
  %368 = vmatprep.subr.mxu0 0.0
  %369 = vmatpush1.msra.mxu0 0.0
  %370 = vmatprep.subr.mxu0 0.0
  %371 = vmatpush1.msra.mxu0 0.0
  %372 = vmatprep.subr.mxu0 0.0
  %373 = vmatpush1.msra.mxu0 0.0
  %374 = vmatprep.subr.mxu0 0.0
  %375 = vmatpush1.msra.mxu0 0.0
  %376 = vmatprep.subr.mxu0 0.0
  %377 = vmatpush1.msra.mxu0 0.0
  %378 = vmatprep.subr.mxu0 0.0
  %379 = vmatpush1.msra.mxu0 0.0
  %380 = vmatprep.subr.mxu0 0.0
  %381 = vmatpush1.msra.mxu0 0.0
  %382 = vmatprep.subr.mxu0 0.0
  %383 = vmatpush1.msra.mxu0 0.0
  %384 = vmatprep.subr.mxu0 0.0
  %385 = vmatpush1.msra.mxu0 0.0
  %386 = vmatprep.subr.mxu0 0.0
  %387 = vmatpush1.msra.mxu0 0.0
  %388 = vmatprep.subr.mxu0 0.0
  %389 = vmatpush1.msra.mxu0 0.0
  %390 = vmatprep.subr.mxu0 0.0
  %391 = vmatpush1.msra.mxu0 0.0
  %392 = vmatprep.subr.mxu0 0.0
  %393 = vmatpush1.msra.mxu0 0.0
  %394 = vmatprep.subr.mxu0 0.0
  %395 = vmatpush1.msra.mxu0 0.0
  %396 = vmatprep.subr.mxu0 0.0
  %397 = vmatpush1.msra.mxu0 0.0
  %398 = vmatprep.subr.mxu0 0.0
  %399 = vmatpush1.msra.mxu0 0.0
  %400 = vmatprep.mubr.f32.mxu0 0.0
  %401 = vmatmul.mubr.f32.gmra.mrb[0].mxu0 %v31
  %v402 = vpop.f32.mrb[0].mxu0
  %v403 = vadd.f32 0.0, %v402
  %v404 = vpop.f32.mrb[0].mxu0
  %405 = vmatprep.mubr.f32.mxu0 0.0
  %406 = vmatmul.mubr.f32.gmra.mrb[0].mxu0 %v32
  %v407 = vpop.f32.mrb[0].mxu0
  %v408 = vadd.f32 0.0, %v407
  %v409 = vpop.f32.mrb[0].mxu0
  %410 = vdwg.mxu0
  %v411 = vmax.f32 %v403, 0.0
  %v412 = vmax.f32 %v408, 0.0
  %s413 = scalar_lea.vmem %s4, 256
  %v414 = vld [vmem:[%s413] sm:$0xff]
  %v415 = vld [vmem:[%s413 + $0x8] sm:$0xff]
  %v416 = vld [vmem:[%s413 + $0x10] sm:$0xff]
  %v417 = vld [vmem:[%s413 + $0x18] sm:$0xff]
  %v418 = vld [vmem:[%s413 + $0x20] sm:$0xff]
  %v419 = vld [vmem:[%s413 + $0x28] sm:$0xff]
  %v420 = vld [vmem:[%s413 + $0x30] sm:$0xff]
  %v421 = vld [vmem:[%s413 + $0x38] sm:$0xff]
  %v422 = vld [vmem:[%s413 + $0x40] sm:$0xff]
  %v423 = vld [vmem:[%s413 + $0x48] sm:$0xff]
  %v424 = vld [vmem:[%s413 + $0x50] sm:$0xff]
  %v425 = vld [vmem:[%s413 + $0x58] sm:$0xff]
  %v426 = vld [vmem:[%s413 + $0x60] sm:$0xff]
  %v427 = vld [vmem:[%s413 + $0x68] sm:$0xff]
  %v428 = vld [vmem:[%s413 + $0x70] sm:$0xff]
  %v429 = vld [vmem:[%s413 + $0x78] sm:$0xff]
  %430 = vmatprep.subr.mxu0 0.0
  %431 = vmatpush1.msra.mxu0 %v414
  %432 = vmatprep.subr.mxu0 0.0
  %433 = vmatpush1.msra.mxu0 %v415
  %434 = vmatprep.subr.mxu0 0.0
  %435 = vmatpush1.msra.mxu0 %v416
  %436 = vmatprep.subr.mxu0 0.0
  %437 = vmatpush1.msra.mxu0 %v417
  %438 = vmatprep.subr.mxu0 0.0
  %439 = vmatpush1.msra.mxu0 %v418
  %440 = vmatprep.subr.mxu0 0.0
  %441 = vmatpush1.msra.mxu0 %v419
  %442 = vmatprep.subr.mxu0 0.0
  %443 = vmatpush1.msra.mxu0 %v420
  %444 = vmatprep.subr.mxu0 0.0
  %445 = vmatpush1.msra.mxu0 %v421
  %446 = vmatprep.subr.mxu0 0.0
  %447 = vmatpush1.msra.mxu0 %v422
  %448 = vmatprep.subr.mxu0 0.0
  %449 = vmatpush1.msra.mxu0 %v423
  %450 = vmatprep.subr.mxu0 0.0
  %451 = vmatpush1.msra.mxu0 %v424
  %452 = vmatprep.subr.mxu0 0.0
  %453 = vmatpush1.msra.mxu0 %v425
  %454 = vmatprep.subr.mxu0 0.0
  %455 = vmatpush1.msra.mxu0 %v426
  %456 = vmatprep.subr.mxu0 0.0
  %457 = vmatpush1.msra.mxu0 %v427
  %458 = vmatprep.subr.mxu0 0.0
  %459 = vmatpush1.msra.mxu0 %v428
  %460 = vmatprep.subr.mxu0 0.0
  %461 = vmatpush1.msra.mxu0 %v429
  %462 = vmatprep.subr.mxu0 0.0
  %463 = vmatpush1.msra.mxu0 0.0
  %464 = vmatprep.subr.mxu0 0.0
  %465 = vmatpush1.msra.mxu0 0.0
  %466 = vmatprep.subr.mxu0 0.0
  %467 = vmatpush1.msra.mxu0 0.0
  %468 = vmatprep.subr.mxu0 0.0
  %469 = vmatpush1.msra.mxu0 0.0
  %470 = vmatprep.subr.mxu0 0.0
  %471 = vmatpush1.msra.mxu0 0.0
  %472 = vmatprep.subr.mxu0 0.0
  %473 = vmatpush1.msra.mxu0 0.0
  %474 = vmatprep.subr.mxu0 0.0
  %475 = vmatpush1.msra.mxu0 0.0
  %476 = vmatprep.subr.mxu0 0.0
  %477 = vmatpush1.msra.mxu0 0.0
  %478 = vmatprep.subr.mxu0 0.0
  %479 = vmatpush1.msra.mxu0 0.0
  %480 = vmatprep.subr.mxu0 0.0
  %481 = vmatpush1.msra.mxu0 0.0
  %482 = vmatprep.subr.mxu0 0.0
  %483 = vmatpush1.msra.mxu0 0.0
  %484 = vmatprep.subr.mxu0 0.0
  %485 = vmatpush1.msra.mxu0 0.0
  %486 = vmatprep.subr.mxu0 0.0
  %487 = vmatpush1.msra.mxu0 0.0
  %488 = vmatprep.subr.mxu0 0.0
  %489 = vmatpush1.msra.mxu0 0.0
  %490 = vmatprep.subr.mxu0 0.0
  %491 = vmatpush1.msra.mxu0 0.0
  %492 = vmatprep.subr.mxu0 0.0
  %493 = vmatpush1.msra.mxu0 0.0
  %494 = vmatprep.mubr.f32.mxu0 0.0
  %495 = vmatmul.mubr.f32.gmra.mrb[0].mxu0 %v33
  %v496 = vpop.f32.mrb[0].mxu0
  %v497 = vadd.f32 0.0, %v496
  %v498 = vpop.f32.mrb[0].mxu0
  %499 = vdwg.mxu0
  %v500 = vmax.f32 %v497, 0.0
  %v501 = vld [vmem:[%s5] sm:$0xff]
  %v502 = vld [vmem:[%s5 + $0x8] sm:$0xff]
  %v503 = vld [vmem:[%s5 + $0x10] sm:$0xff]
  %v504 = vld [vmem:[%s5 + $0x18] sm:$0xff]
  %v505 = vld [vmem:[%s5 + $0x20] sm:$0xff]
  %v506 = vld [vmem:[%s5 + $0x28] sm:$0xff]
  %v507 = vld [vmem:[%s5 + $0x30] sm:$0xff]
  %v508 = vld [vmem:[%s5 + $0x38] sm:$0xff]
  %v509 = vld [vmem:[%s5 + $0x40] sm:$0xff]
  %v510 = vld [vmem:[%s5 + $0x48] sm:$0xff]
  %v511 = vld [vmem:[%s5 + $0x50] sm:$0xff]
  %v512 = vld [vmem:[%s5 + $0x58] sm:$0xff]
  %v513 = vld [vmem:[%s5 + $0x60] sm:$0xff]
  %v514 = vld [vmem:[%s5 + $0x68] sm:$0xff]
  %v515 = vld [vmem:[%s5 + $0x70] sm:$0xff]
  %v516 = vld [vmem:[%s5 + $0x78] sm:$0xff]
  %v517 = vld [vmem:[%s5 + $0x80] sm:$0xff]
  %v518 = vld [vmem:[%s5 + $0x88] sm:$0xff]
  %v519 = vld [vmem:[%s5 + $0x90] sm:$0xff]
  %v520 = vld [vmem:[%s5 + $0x98] sm:$0xff]
  %v521 = vld [vmem:[%s5 + $0xa0] sm:$0xff]
  %v522 = vld [vmem:[%s5 + $0xa8] sm:$0xff]
  %v523 = vld [vmem:[%s5 + $0xb0] sm:$0xff]
  %v524 = vld [vmem:[%s5 + $0xb8] sm:$0xff]
  %v525 = vld [vmem:[%s5 + $0xc0] sm:$0xff]
  %v526 = vld [vmem:[%s5 + $0xc8] sm:$0xff]
  %v527 = vld [vmem:[%s5 + $0xd0] sm:$0xff]
  %v528 = vld [vmem:[%s5 + $0xd8] sm:$0xff]
  %v529 = vld [vmem:[%s5 + $0xe0] sm:$0xff]
  %v530 = vld [vmem:[%s5 + $0xe8] sm:$0xff]
  %v531 = vld [vmem:[%s5 + $0xf0] sm:$0xff]
  %v532 = vld [vmem:[%s5 + $0xf8] sm:$0xff]
  %533 = vmatprep.subr.mxu0 %v502
  %534 = vmatpush1.msra.mxu0 %v501
  %535 = vmatprep.subr.mxu0 %v504
  %536 = vmatpush1.msra.mxu0 %v503
  %537 = vmatprep.subr.mxu0 %v506
  %538 = vmatpush1.msra.mxu0 %v505
  %539 = vmatprep.subr.mxu0 %v508
  %540 = vmatpush1.msra.mxu0 %v507
  %541 = vmatprep.subr.mxu0 %v510
  %542 = vmatpush1.msra.mxu0 %v509
  %543 = vmatprep.subr.mxu0 %v512
  %544 = vmatpush1.msra.mxu0 %v511
  %545 = vmatprep.subr.mxu0 %v514
  %546 = vmatpush1.msra.mxu0 %v513
  %547 = vmatprep.subr.mxu0 %v516
  %548 = vmatpush1.msra.mxu0 %v515
  %549 = vmatprep.subr.mxu0 %v518
  %550 = vmatpush1.msra.mxu0 %v517
  %551 = vmatprep.subr.mxu0 %v520
  %552 = vmatpush1.msra.mxu0 %v519
  %553 = vmatprep.subr.mxu0 %v522
  %554 = vmatpush1.msra.mxu0 %v521
  %555 = vmatprep.subr.mxu0 %v524
  %556 = vmatpush1.msra.mxu0 %v523
  %557 = vmatprep.subr.mxu0 %v526
  %558 = vmatpush1.msra.mxu0 %v525
  %559 = vmatprep.subr.mxu0 %v528
  %560 = vmatpush1.msra.mxu0 %v527
  %561 = vmatprep.subr.mxu0 %v530
  %562 = vmatpush1.msra.mxu0 %v529
  %563 = vmatprep.subr.mxu0 %v532
  %564 = vmatpush1.msra.mxu0 %v531
  %565 = vmatprep.subr.mxu0 0.0
  %566 = vmatpush1.msra.mxu0 0.0
  %567 = vmatprep.subr.mxu0 0.0
  %568 = vmatpush1.msra.mxu0 0.0
  %569 = vmatprep.subr.mxu0 0.0
  %570 = vmatpush1.msra.mxu0 0.0
  %571 = vmatprep.subr.mxu0 0.0
  %572 = vmatpush1.msra.mxu0 0.0
  %573 = vmatprep.subr.mxu0 0.0
  %574 = vmatpush1.msra.mxu0 0.0
  %575 = vmatprep.subr.mxu0 0.0
  %576 = vmatpush1.msra.mxu0 0.0
  %577 = vmatprep.subr.mxu0 0.0
  %578 = vmatpush1.msra.mxu0 0.0
  %579 = vmatprep.subr.mxu0 0.0
  %580 = vmatpush1.msra.mxu0 0.0
  %581 = vmatprep.subr.mxu0 0.0
  %582 = vmatpush1.msra.mxu0 0.0
  %583 = vmatprep.subr.mxu0 0.0
  %584 = vmatpush1.msra.mxu0 0.0
  %585 = vmatprep.subr.mxu0 0.0
  %586 = vmatpush1.msra.mxu0 0.0
  %587 = vmatprep.subr.mxu0 0.0
  %588 = vmatpush1.msra.mxu0 0.0
  %589 = vmatprep.subr.mxu0 0.0
  %590 = vmatpush1.msra.mxu0 0.0
  %591 = vmatprep.subr.mxu0 0.0
  %592 = vmatpush1.msra.mxu0 0.0
  %593 = vmatprep.subr.mxu0 0.0
  %594 = vmatpush1.msra.mxu0 0.0
  %595 = vmatprep.subr.mxu0 0.0
  %596 = vmatpush1.msra.mxu0 0.0
  %597 = vmatprep.mubr.f32.mxu0 0.0
  %598 = vmatmul.mubr.f32.gmra.mrb[0].mxu0 %v317
  %v599 = vpop.f32.mrb[0].mxu0
  %v600 = vadd.f32 0.0, %v599
  %v601 = vpop.f32.mrb[0].mxu0
  %v602 = vadd.f32 0.0, %v601
  %603 = vmatprep.mubr.f32.mxu0 0.0
  %604 = vmatmul.mubr.f32.gmra.mrb[0].mxu0 %v318
  %v605 = vpop.f32.mrb[0].mxu0
  %v606 = vadd.f32 0.0, %v605
  %v607 = vpop.f32.mrb[0].mxu0
  %v608 = vadd.f32 0.0, %v607
  %609 = vdwg.mxu0
  %s610 = scalar_lea.vmem %s5, 256
  %v611 = vld [vmem:[%s610] sm:$0xff]
  %v612 = vld [vmem:[%s610 + $0x8] sm:$0xff]
  %v613 = vld [vmem:[%s610 + $0x10] sm:$0xff]
  %v614 = vld [vmem:[%s610 + $0x18] sm:$0xff]
  %v615 = vld [vmem:[%s610 + $0x20] sm:$0xff]
  %v616 = vld [vmem:[%s610 + $0x28] sm:$0xff]
  %v617 = vld [vmem:[%s610 + $0x30] sm:$0xff]
  %v618 = vld [vmem:[%s610 + $0x38] sm:$0xff]
  %v619 = vld [vmem:[%s610 + $0x40] sm:$0xff]
  %v620 = vld [vmem:[%s610 + $0x48] sm:$0xff]
  %v621 = vld [vmem:[%s610 + $0x50] sm:$0xff]
  %v622 = vld [vmem:[%s610 + $0x58] sm:$0xff]
  %v623 = vld [vmem:[%s610 + $0x60] sm:$0xff]
  %v624 = vld [vmem:[%s610 + $0x68] sm:$0xff]
  %v625 = vld [vmem:[%s610 + $0x70] sm:$0xff]
  %v626 = vld [vmem:[%s610 + $0x78] sm:$0xff]
  %v627 = vld [vmem:[%s610 + $0x80] sm:$0xff]
  %v628 = vld [vmem:[%s610 + $0x88] sm:$0xff]
  %v629 = vld [vmem:[%s610 + $0x90] sm:$0xff]
  %v630 = vld [vmem:[%s610 + $0x98] sm:$0xff]
  %v631 = vld [vmem:[%s610 + $0xa0] sm:$0xff]
  %v632 = vld [vmem:[%s610 + $0xa8] sm:$0xff]
  %v633 = vld [vmem:[%s610 + $0xb0] sm:$0xff]
  %v634 = vld [vmem:[%s610 + $0xb8] sm:$0xff]
  %v635 = vld [vmem:[%s610 + $0xc0] sm:$0xff]
  %v636 = vld [vmem:[%s610 + $0xc8] sm:$0xff]
  %v637 = vld [vmem:[%s610 + $0xd0] sm:$0xff]
  %v638 = vld [vmem:[%s610 + $0xd8] sm:$0xff]
  %v639 = vld [vmem:[%s610 + $0xe0] sm:$0xff]
  %v640 = vld [vmem:[%s610 + $0xe8] sm:$0xff]
  %v641 = vld [vmem:[%s610 + $0xf0] sm:$0xff]
  %v642 = vld [vmem:[%s610 + $0xf8] sm:$0xff]
  %643 = vmatprep.subr.mxu0 %v612
  %644 = vmatpush1.msra.mxu0 %v611
  %645 = vmatprep.subr.mxu0 %v614
  %646 = vmatpush1.msra.mxu0 %v613
  %647 = vmatprep.subr.mxu0 %v616
  %648 = vmatpush1.msra.mxu0 %v615
  %649 = vmatprep.subr.mxu0 %v618
  %650 = vmatpush1.msra.mxu0 %v617
  %651 = vmatprep.subr.mxu0 %v620
  %652 = vmatpush1.msra.mxu0 %v619
  %653 = vmatprep.subr.mxu0 %v622
  %654 = vmatpush1.msra.mxu0 %v621
  %655 = vmatprep.subr.mxu0 %v624
  %656 = vmatpush1.msra.mxu0 %v623
  %657 = vmatprep.subr.mxu0 %v626
  %658 = vmatpush1.msra.mxu0 %v625
  %659 = vmatprep.subr.mxu0 %v628
  %660 = vmatpush1.msra.mxu0 %v627
  %661 = vmatprep.subr.mxu0 %v630
  %662 = vmatpush1.msra.mxu0 %v629
  %663 = vmatprep.subr.mxu0 %v632
  %664 = vmatpush1.msra.mxu0 %v631
  %665 = vmatprep.subr.mxu0 %v634
  %666 = vmatpush1.msra.mxu0 %v633
  %667 = vmatprep.subr.mxu0 %v636
  %668 = vmatpush1.msra.mxu0 %v635
  %669 = vmatprep.subr.mxu0 %v638
  %670 = vmatpush1.msra.mxu0 %v637
  %671 = vmatprep.subr.mxu0 %v640
  %672 = vmatpush1.msra.mxu0 %v639
  %673 = vmatprep.subr.mxu0 %v642
  %674 = vmatpush1.msra.mxu0 %v641
  %675 = vmatprep.subr.mxu0 0.0
  %676 = vmatpush1.msra.mxu0 0.0
  %677 = vmatprep.subr.mxu0 0.0
  %678 = vmatpush1.msra.mxu0 0.0
  %679 = vmatprep.subr.mxu0 0.0
  %680 = vmatpush1.msra.mxu0 0.0
  %681 = vmatprep.subr.mxu0 0.0
  %682 = vmatpush1.msra.mxu0 0.0
  %683 = vmatprep.subr.mxu0 0.0
  %684 = vmatpush1.msra.mxu0 0.0
  %685 = vmatprep.subr.mxu0 0.0
  %686 = vmatpush1.msra.mxu0 0.0
  %687 = vmatprep.subr.mxu0 0.0
  %688 = vmatpush1.msra.mxu0 0.0
  %689 = vmatprep.subr.mxu0 0.0
  %690 = vmatpush1.msra.mxu0 0.0
  %691 = vmatprep.subr.mxu0 0.0
  %692 = vmatpush1.msra.mxu0 0.0
  %693 = vmatprep.subr.mxu0 0.0
  %694 = vmatpush1.msra.mxu0 0.0
  %695 = vmatprep.subr.mxu0 0.0
  %696 = vmatpush1.msra.mxu0 0.0
  %697 = vmatprep.subr.mxu0 0.0
  %698 = vmatpush1.msra.mxu0 0.0
  %699 = vmatprep.subr.mxu0 0.0
  %700 = vmatpush1.msra.mxu0 0.0
  %701 = vmatprep.subr.mxu0 0.0
  %702 = vmatpush1.msra.mxu0 0.0
  %703 = vmatprep.subr.mxu0 0.0
  %704 = vmatpush1.msra.mxu0 0.0
  %705 = vmatprep.subr.mxu0 0.0
  %706 = vmatpush1.msra.mxu0 0.0
  %707 = vmatprep.mubr.f32.mxu0 0.0
  %708 = vmatmul.mubr.f32.gmra.mrb[0].mxu0 %v411
  %v709 = vpop.f32.mrb[0].mxu0
  %v710 = vadd.f32 0.0, %v709
  %v711 = vpop.f32.mrb[0].mxu0
  %v712 = vadd.f32 0.0, %v711
  %713 = vmatprep.mubr.f32.mxu0 0.0
  %714 = vmatmul.mubr.f32.gmra.mrb[0].mxu0 %v412
  %v715 = vpop.f32.mrb[0].mxu0
  %v716 = vadd.f32 0.0, %v715
  %v717 = vpop.f32.mrb[0].mxu0
  %v718 = vadd.f32 0.0, %v717
  %719 = vdwg.mxu0
  %s720 = scalar_lea.vmem %s5, 512
  %v721 = vld [vmem:[%s720] sm:$0xff]
  %v722 = vld [vmem:[%s720 + $0x8] sm:$0xff]
  %v723 = vld [vmem:[%s720 + $0x10] sm:$0xff]
  %v724 = vld [vmem:[%s720 + $0x18] sm:$0xff]
  %v725 = vld [vmem:[%s720 + $0x20] sm:$0xff]
  %v726 = vld [vmem:[%s720 + $0x28] sm:$0xff]
  %v727 = vld [vmem:[%s720 + $0x30] sm:$0xff]
  %v728 = vld [vmem:[%s720 + $0x38] sm:$0xff]
  %v729 = vld [vmem:[%s720 + $0x40] sm:$0xff]
  %v730 = vld [vmem:[%s720 + $0x48] sm:$0xff]
  %v731 = vld [vmem:[%s720 + $0x50] sm:$0xff]
  %v732 = vld [vmem:[%s720 + $0x58] sm:$0xff]
  %v733 = vld [vmem:[%s720 + $0x60] sm:$0xff]
  %v734 = vld [vmem:[%s720 + $0x68] sm:$0xff]
  %v735 = vld [vmem:[%s720 + $0x70] sm:$0xff]
  %v736 = vld [vmem:[%s720 + $0x78] sm:$0xff]
  %v737 = vld [vmem:[%s720 + $0x80] sm:$0xff]
  %v738 = vld [vmem:[%s720 + $0x88] sm:$0xff]
  %v739 = vld [vmem:[%s720 + $0x90] sm:$0xff]
  %v740 = vld [vmem:[%s720 + $0x98] sm:$0xff]
  %v741 = vld [vmem:[%s720 + $0xa0] sm:$0xff]
  %v742 = vld [vmem:[%s720 + $0xa8] sm:$0xff]
  %v743 = vld [vmem:[%s720 + $0xb0] sm:$0xff]
  %v744 = vld [vmem:[%s720 + $0xb8] sm:$0xff]
  %v745 = vld [vmem:[%s720 + $0xc0] sm:$0xff]
  %v746 = vld [vmem:[%s720 + $0xc8] sm:$0xff]
  %v747 = vld [vmem:[%s720 + $0xd0] sm:$0xff]
  %v748 = vld [vmem:[%s720 + $0xd8] sm:$0xff]
  %v749 = vld [vmem:[%s720 + $0xe0] sm:$0xff]
  %v750 = vld [vmem:[%s720 + $0xe8] sm:$0xff]
  %v751 = vld [vmem:[%s720 + $0xf0] sm:$0xff]
  %v752 = vld [vmem:[%s720 + $0xf8] sm:$0xff]
  %753 = vmatprep.subr.mxu0 %v722
  %754 = vmatpush1.msra.mxu0 %v721
  %755 = vmatprep.subr.mxu0 %v724
  %756 = vmatpush1.msra.mxu0 %v723
  %757 = vmatprep.subr.mxu0 %v726
  %758 = vmatpush1.msra.mxu0 %v725
  %759 = vmatprep.subr.mxu0 %v728
  %760 = vmatpush1.msra.mxu0 %v727
  %761 = vmatprep.subr.mxu0 %v730
  %762 = vmatpush1.msra.mxu0 %v729
  %763 = vmatprep.subr.mxu0 %v732
  %764 = vmatpush1.msra.mxu0 %v731
  %765 = vmatprep.subr.mxu0 %v734
  %766 = vmatpush1.msra.mxu0 %v733
  %767 = vmatprep.subr.mxu0 %v736
  %768 = vmatpush1.msra.mxu0 %v735
  %769 = vmatprep.subr.mxu0 %v738
  %770 = vmatpush1.msra.mxu0 %v737
  %771 = vmatprep.subr.mxu0 %v740
  %772 = vmatpush1.msra.mxu0 %v739
  %773 = vmatprep.subr.mxu0 %v742
  %774 = vmatpush1.msra.mxu0 %v741
  %775 = vmatprep.subr.mxu0 %v744
  %776 = vmatpush1.msra.mxu0 %v743
  %777 = vmatprep.subr.mxu0 %v746
  %778 = vmatpush1.msra.mxu0 %v745
  %779 = vmatprep.subr.mxu0 %v748
  %780 = vmatpush1.msra.mxu0 %v747
  %781 = vmatprep.subr.mxu0 %v750
  %782 = vmatpush1.msra.mxu0 %v749
  %783 = vmatprep.subr.mxu0 %v752
  %784 = vmatpush1.msra.mxu0 %v751
  %785 = vmatprep.subr.mxu0 0.0
  %786 = vmatpush1.msra.mxu0 0.0
  %787 = vmatprep.subr.mxu0 0.0
  %788 = vmatpush1.msra.mxu0 0.0
  %789 = vmatprep.subr.mxu0 0.0
  %790 = vmatpush1.msra.mxu0 0.0
  %791 = vmatprep.subr.mxu0 0.0
  %792 = vmatpush1.msra.mxu0 0.0
  %793 = vmatprep.subr.mxu0 0.0
  %794 = vmatpush1.msra.mxu0 0.0
  %795 = vmatprep.subr.mxu0 0.0
  %796 = vmatpush1.msra.mxu0 0.0
  %797 = vmatprep.subr.mxu0 0.0
  %798 = vmatpush1.msra.mxu0 0.0
  %799 = vmatprep.subr.mxu0 0.0
  %800 = vmatpush1.msra.mxu0 0.0
  %801 = vmatprep.subr.mxu0 0.0
  %802 = vmatpush1.msra.mxu0 0.0
  %803 = vmatprep.subr.mxu0 0.0
  %804 = vmatpush1.msra.mxu0 0.0
  %805 = vmatprep.subr.mxu0 0.0
  %806 = vmatpush1.msra.mxu0 0.0
  %807 = vmatprep.subr.mxu0 0.0
  %808 = vmatpush1.msra.mxu0 0.0
  %809 = vmatprep.subr.mxu0 0.0
  %810 = vmatpush1.msra.mxu0 0.0
  %811 = vmatprep.subr.mxu0 0.0
  %812 = vmatpush1.msra.mxu0 0.0
  %813 = vmatprep.subr.mxu0 0.0
  %814 = vmatpush1.msra.mxu0 0.0
  %815 = vmatprep.subr.mxu0 0.0
  %816 = vmatpush1.msra.mxu0 0.0
  %817 = vmatprep.mubr.f32.mxu0 0.0
  %818 = vmatmul.mubr.f32.gmra.mrb[0].mxu0 %v500
  %v819 = vpop.f32.mrb[0].mxu0
  %v820 = vadd.f32 0.0, %v819
  %v821 = vpop.f32.mrb[0].mxu0
  %822 = vdwg.mxu0
  %v823 = vld [vmem:[%s3] sm:$0xff]
  %v824 = vld [vmem:[%s3 + $0x8] sm:$0xff]
  %v825 = vld [vmem:[%s2] sm:$0xff]
  %v826 = vld [vmem:[%s2 + $0x8] sm:$0xff]
  %vm827 = vcmask 195584
  %v829 = vsel %vm827, %v823, 0
  %v832 = vsel %vm827, %v824, 0
  %834 = vmatprep.subr.mxu0 0.0
  %835 = vmatpush1.msra.mxu0 %v710
  %836 = vmatprep.subr.mxu0 0.0
  %837 = vmatpush1.msra.mxu0 %v716
  %838 = vmatprep.subr.mxu0 0.0
  %839 = vmatpush1.msra.mxu0 %v820
  %840 = vmatprep.subr.mxu0 0.0
  %841 = vmatpush1.msra.mxu0 0.0
  %842 = vmatprep.subr.mxu0 0.0
  %843 = vmatpush1.msra.mxu0 0.0
  %844 = vmatprep.subr.mxu0 0.0
  %845 = vmatpush1.msra.mxu0 0.0
  %846 = vmatprep.subr.mxu0 0.0
  %847 = vmatpush1.msra.mxu0 0.0
  %848 = vmatprep.subr.mxu0 0.0
  %849 = vmatpush1.msra.mxu0 0.0
  %850 = vmatprep.subr.mxu0 0.0
  %851 = vmatpush1.msra.mxu0 0.0
  %852 = vmatprep.subr.mxu0 0.0
  %853 = vmatpush1.msra.mxu0 0.0
  %854 = vmatprep.subr.mxu0 0.0
  %855 = vmatpush1.msra.mxu0 0.0
  %856 = vmatprep.subr.mxu0 0.0
  %857 = vmatpush1.msra.mxu0 0.0
  %858 = vmatprep.subr.mxu0 0.0
  %859 = vmatpush1.msra.mxu0 0.0
  %860 = vmatprep.subr.mxu0 0.0
  %861 = vmatpush1.msra.mxu0 0.0
  %862 = vmatprep.subr.mxu0 0.0
  %863 = vmatpush1.msra.mxu0 0.0
  %864 = vmatprep.subr.mxu0 0.0
  %865 = vmatpush1.msra.mxu0 0.0
  %866 = vmatprep.subr.mxu0 0.0
  %867 = vmatpush1.msra.mxu0 0.0
  %868 = vmatprep.subr.mxu0 0.0
  %869 = vmatpush1.msra.mxu0 0.0
  %870 = vmatprep.subr.mxu0 0.0
  %871 = vmatpush1.msra.mxu0 0.0
  %872 = vmatprep.subr.mxu0 0.0
  %873 = vmatpush1.msra.mxu0 0.0
  %874 = vmatprep.subr.mxu0 0.0
  %875 = vmatpush1.msra.mxu0 0.0
  %876 = vmatprep.subr.mxu0 0.0
  %877 = vmatpush1.msra.mxu0 0.0
  %878 = vmatprep.subr.mxu0 0.0
  %879 = vmatpush1.msra.mxu0 0.0
  %880 = vmatprep.subr.mxu0 0.0
  %881 = vmatpush1.msra.mxu0 0.0
  %882 = vmatprep.subr.mxu0 0.0
  %883 = vmatpush1.msra.mxu0 0.0
  %884 = vmatprep.subr.mxu0 0.0
  %885 = vmatpush1.msra.mxu0 0.0
  %886 = vmatprep.subr.mxu0 0.0
  %887 = vmatpush1.msra.mxu0 0.0
  %888 = vmatprep.subr.mxu0 0.0
  %889 = vmatpush1.msra.mxu0 0.0
  %890 = vmatprep.subr.mxu0 0.0
  %891 = vmatpush1.msra.mxu0 0.0
  %892 = vmatprep.subr.mxu0 0.0
  %893 = vmatpush1.msra.mxu0 0.0
  %894 = vmatprep.subr.mxu0 0.0
  %895 = vmatpush1.msra.mxu0 0.0
  %896 = vmatprep.subr.mxu0 0.0
  %897 = vmatpush1.msra.mxu0 0.0
  %898 = vmatprep.mubr.f32.mxu0 0.0
  %899 = vmatmul.mubr.f32.gmra.mrb[0].mxu0 %v829
  %v900 = vpop.f32.mrb[0].mxu0
  %v901 = vadd.f32 %v602, %v900
  %v902 = vpop.f32.mrb[0].mxu0
  %903 = vmatprep.mubr.f32.mxu0 0.0
  %904 = vmatmul.mubr.f32.gmra.mrb[0].mxu0 %v832
  %v905 = vpop.f32.mrb[0].mxu0
  %v906 = vadd.f32 %v608, %v905
  %v907 = vpop.f32.mrb[0].mxu0
  %908 = vdwg.mxu0
  %v909 = vmax.f32 %v901, 0.0
  %v910 = vmax.f32 %v906, 0.0
  %v912 = vsel %vm68, %v825, 0
  %v915 = vsel %vm68, %v826, 0
  %917 = vmatprep.subr.mxu0 0.0
  %918 = vmatpush1.msra.mxu0 %v600
  %919 = vmatprep.subr.mxu0 0.0
  %920 = vmatpush1.msra.mxu0 %v606
  %921 = vmatprep.subr.mxu0 0.0
  %922 = vmatpush1.msra.mxu0 0.0
  %923 = vmatprep.subr.mxu0 0.0
  %924 = vmatpush1.msra.mxu0 0.0
  %925 = vmatprep.subr.mxu0 0.0
  %926 = vmatpush1.msra.mxu0 0.0
  %927 = vmatprep.subr.mxu0 0.0
  %928 = vmatpush1.msra.mxu0 0.0
  %929 = vmatprep.subr.mxu0 0.0
  %930 = vmatpush1.msra.mxu0 0.0
  %931 = vmatprep.subr.mxu0 0.0
  %932 = vmatpush1.msra.mxu0 0.0
  %933 = vmatprep.subr.mxu0 0.0
  %934 = vmatpush1.msra.mxu0 0.0
  %935 = vmatprep.subr.mxu0 0.0
  %936 = vmatpush1.msra.mxu0 0.0
  %937 = vmatprep.subr.mxu0 0.0
  %938 = vmatpush1.msra.mxu0 0.0
  %939 = vmatprep.subr.mxu0 0.0
  %940 = vmatpush1.msra.mxu0 0.0
  %941 = vmatprep.subr.mxu0 0.0
  %942 = vmatpush1.msra.mxu0 0.0
  %943 = vmatprep.subr.mxu0 0.0
  %944 = vmatpush1.msra.mxu0 0.0
  %945 = vmatprep.subr.mxu0 0.0
  %946 = vmatpush1.msra.mxu0 0.0
  %947 = vmatprep.subr.mxu0 0.0
  %948 = vmatpush1.msra.mxu0 0.0
  %949 = vmatprep.subr.mxu0 0.0
  %950 = vmatpush1.msra.mxu0 0.0
  %951 = vmatprep.subr.mxu0 0.0
  %952 = vmatpush1.msra.mxu0 0.0
  %953 = vmatprep.subr.mxu0 0.0
  %954 = vmatpush1.msra.mxu0 0.0
  %955 = vmatprep.subr.mxu0 0.0
  %956 = vmatpush1.msra.mxu0 0.0
  %957 = vmatprep.subr.mxu0 0.0
  %958 = vmatpush1.msra.mxu0 0.0
  %959 = vmatprep.subr.mxu0 0.0
  %960 = vmatpush1.msra.mxu0 0.0
  %961 = vmatprep.subr.mxu0 0.0
  %962 = vmatpush1.msra.mxu0 0.0
  %963 = vmatprep.subr.mxu0 0.0
  %964 = vmatpush1.msra.mxu0 0.0
  %965 = vmatprep.subr.mxu0 0.0
  %966 = vmatpush1.msra.mxu0 0.0
  %967 = vmatprep.subr.mxu0 0.0
  %968 = vmatpush1.msra.mxu0 0.0
  %969 = vmatprep.subr.mxu0 0.0
  %970 = vmatpush1.msra.mxu0 0.0
  %971 = vmatprep.subr.mxu0 0.0
  %972 = vmatpush1.msra.mxu0 0.0
  %973 = vmatprep.subr.mxu0 0.0
  %974 = vmatpush1.msra.mxu0 0.0
  %975 = vmatprep.subr.mxu0 0.0
  %976 = vmatpush1.msra.mxu0 0.0
  %977 = vmatprep.subr.mxu0 0.0
  %978 = vmatpush1.msra.mxu0 0.0
  %979 = vmatprep.subr.mxu0 0.0
  %980 = vmatpush1.msra.mxu0 0.0
  %981 = vmatprep.mubr.f32.mxu0 0.0
  %982 = vmatmul.mubr.f32.gmra.mrb[0].mxu0 %v912
  %v983 = vpop.f32.mrb[0].mxu0
  %v984 = vadd.f32 %v712, %v983
  %v985 = vpop.f32.mrb[0].mxu0
  %986 = vmatprep.mubr.f32.mxu0 0.0
  %987 = vmatmul.mubr.f32.gmra.mrb[0].mxu0 %v915
  %v988 = vpop.f32.mrb[0].mxu0
  %v989 = vadd.f32 %v718, %v988
  %v990 = vpop.f32.mrb[0].mxu0
  %991 = vdwg.mxu0
  %v992 = vmax.f32 %v984, 0.0
  %v993 = vmax.f32 %v989, 0.0
  %v994 = vld [vmem:[%s6] sm:$0xff]
  %v995 = vld [vmem:[%s6 + $0x8] sm:$0xff]
  %v997 = vsel %vm68, %v994, 0
  %v1000 = vsel %vm68, %v995, 0
  %1002 = vmatprep.subr.mxu0 0.0
  %1003 = vmatpush1.msra.mxu0 %v909
  %1004 = vmatprep.subr.mxu0 0.0
  %1005 = vmatpush1.msra.mxu0 %v910
  %1006 = vmatprep.subr.mxu0 0.0
  %1007 = vmatpush1.msra.mxu0 0.0
  %1008 = vmatprep.subr.mxu0 0.0
  %1009 = vmatpush1.msra.mxu0 0.0
  %1010 = vmatprep.subr.mxu0 0.0
  %1011 = vmatpush1.msra.mxu0 0.0
  %1012 = vmatprep.subr.mxu0 0.0
  %1013 = vmatpush1.msra.mxu0 0.0
  %1014 = vmatprep.subr.mxu0 0.0
  %1015 = vmatpush1.msra.mxu0 0.0
  %1016 = vmatprep.subr.mxu0 0.0
  %1017 = vmatpush1.msra.mxu0 0.0
  %1018 = vmatprep.subr.mxu0 0.0
  %1019 = vmatpush1.msra.mxu0 0.0
  %1020 = vmatprep.subr.mxu0 0.0
  %1021 = vmatpush1.msra.mxu0 0.0
  %1022 = vmatprep.subr.mxu0 0.0
  %1023 = vmatpush1.msra.mxu0 0.0
  %1024 = vmatprep.subr.mxu0 0.0
  %1025 = vmatpush1.msra.mxu0 0.0
  %1026 = vmatprep.subr.mxu0 0.0
  %1027 = vmatpush1.msra.mxu0 0.0
  %1028 = vmatprep.subr.mxu0 0.0
  %1029 = vmatpush1.msra.mxu0 0.0
  %1030 = vmatprep.subr.mxu0 0.0
  %1031 = vmatpush1.msra.mxu0 0.0
  %1032 = vmatprep.subr.mxu0 0.0
  %1033 = vmatpush1.msra.mxu0 0.0
  %1034 = vmatprep.subr.mxu0 0.0
  %1035 = vmatpush1.msra.mxu0 0.0
  %1036 = vmatprep.subr.mxu0 0.0
  %1037 = vmatpush1.msra.mxu0 0.0
  %1038 = vmatprep.subr.mxu0 0.0
  %1039 = vmatpush1.msra.mxu0 0.0
  %1040 = vmatprep.subr.mxu0 0.0
  %1041 = vmatpush1.msra.mxu0 0.0
  %1042 = vmatprep.subr.mxu0 0.0
  %1043 = vmatpush1.msra.mxu0 0.0
  %1044 = vmatprep.subr.mxu0 0.0
  %1045 = vmatpush1.msra.mxu0 0.0
  %1046 = vmatprep.subr.mxu0 0.0
  %1047 = vmatpush1.msra.mxu0 0.0
  %1048 = vmatprep.subr.mxu0 0.0
  %1049 = vmatpush1.msra.mxu0 0.0
  %1050 = vmatprep.subr.mxu0 0.0
  %1051 = vmatpush1.msra.mxu0 0.0
  %1052 = vmatprep.subr.mxu0 0.0
  %1053 = vmatpush1.msra.mxu0 0.0
  %1054 = vmatprep.subr.mxu0 0.0
  %1055 = vmatpush1.msra.mxu0 0.0
  %1056 = vmatprep.subr.mxu0 0.0
  %1057 = vmatpush1.msra.mxu0 0.0
  %1058 = vmatprep.subr.mxu0 0.0
  %1059 = vmatpush1.msra.mxu0 0.0
  %1060 = vmatprep.subr.mxu0 0.0
  %1061 = vmatpush1.msra.mxu0 0.0
  %1062 = vmatprep.subr.mxu0 0.0
  %1063 = vmatpush1.msra.mxu0 0.0
  %1064 = vmatprep.subr.mxu0 0.0
  %1065 = vmatpush1.msra.mxu0 0.0
  %1066 = vmatprep.mubr.f32.mxu0 0.0
  %1067 = vmatmul.mubr.f32.gmra.mrb[0].mxu0 %v997
  %v1068 = vpop.f32.mrb[0].mxu0
  %v1069 = vadd.f32 0.0, %v1068
  %v1070 = vpop.f32.mrb[0].mxu0
  %1071 = vmatprep.mubr.f32.mxu0 0.0
  %1072 = vmatmul.mubr.f32.gmra.mrb[0].mxu0 %v1000
  %v1073 = vpop.f32.mrb[0].mxu0
  %v1074 = vadd.f32 0.0, %v1073
  %v1075 = vpop.f32.mrb[0].mxu0
  %1076 = vdwg.mxu0
  %v1077 = vld [vmem:[%s7] sm:$0xff]
  %v1078 = vld [vmem:[%s7 + $0x8] sm:$0xff]
  %v1080 = vsel %vm68, %v1077, 0
  %v1083 = vsel %vm68, %v1078, 0
  %1085 = vmatprep.subr.mxu0 0.0
  %1086 = vmatpush1.msra.mxu0 %v992
  %1087 = vmatprep.subr.mxu0 0.0
  %1088 = vmatpush1.msra.mxu0 %v993
  %1089 = vmatprep.subr.mxu0 0.0
  %1090 = vmatpush1.msra.mxu0 0.0
  %1091 = vmatprep.subr.mxu0 0.0
  %1092 = vmatpush1.msra.mxu0 0.0
  %1093 = vmatprep.subr.mxu0 0.0
  %1094 = vmatpush1.msra.mxu0 0.0
  %1095 = vmatprep.subr.mxu0 0.0
  %1096 = vmatpush1.msra.mxu0 0.0
  %1097 = vmatprep.subr.mxu0 0.0
  %1098 = vmatpush1.msra.mxu0 0.0
  %1099 = vmatprep.subr.mxu0 0.0
  %1100 = vmatpush1.msra.mxu0 0.0
  %1101 = vmatprep.subr.mxu0 0.0
  %1102 = vmatpush1.msra.mxu0 0.0
  %1103 = vmatprep.subr.mxu0 0.0
  %1104 = vmatpush1.msra.mxu0 0.0
  %1105 = vmatprep.subr.mxu0 0.0
  %1106 = vmatpush1.msra.mxu0 0.0
  %1107 = vmatprep.subr.mxu0 0.0
  %1108 = vmatpush1.msra.mxu0 0.0
  %1109 = vmatprep.subr.mxu0 0.0
  %1110 = vmatpush1.msra.mxu0 0.0
  %1111 = vmatprep.subr.mxu0 0.0
  %1112 = vmatpush1.msra.mxu0 0.0
  %1113 = vmatprep.subr.mxu0 0.0
  %1114 = vmatpush1.msra.mxu0 0.0
  %1115 = vmatprep.subr.mxu0 0.0
  %1116 = vmatpush1.msra.mxu0 0.0
  %1117 = vmatprep.subr.mxu0 0.0
  %1118 = vmatpush1.msra.mxu0 0.0
  %1119 = vmatprep.subr.mxu0 0.0
  %1120 = vmatpush1.msra.mxu0 0.0
  %1121 = vmatprep.subr.mxu0 0.0
  %1122 = vmatpush1.msra.mxu0 0.0
  %1123 = vmatprep.subr.mxu0 0.0
  %1124 = vmatpush1.msra.mxu0 0.0
  %1125 = vmatprep.subr.mxu0 0.0
  %1126 = vmatpush1.msra.mxu0 0.0
  %1127 = vmatprep.subr.mxu0 0.0
  %1128 = vmatpush1.msra.mxu0 0.0
  %1129 = vmatprep.subr.mxu0 0.0
  %1130 = vmatpush1.msra.mxu0 0.0
  %1131 = vmatprep.subr.mxu0 0.0
  %1132 = vmatpush1.msra.mxu0 0.0
  %1133 = vmatprep.subr.mxu0 0.0
  %1134 = vmatpush1.msra.mxu0 0.0
  %1135 = vmatprep.subr.mxu0 0.0
  %1136 = vmatpush1.msra.mxu0 0.0
  %1137 = vmatprep.subr.mxu0 0.0
  %1138 = vmatpush1.msra.mxu0 0.0
  %1139 = vmatprep.subr.mxu0 0.0
  %1140 = vmatpush1.msra.mxu0 0.0
  %1141 = vmatprep.subr.mxu0 0.0
  %1142 = vmatpush1.msra.mxu0 0.0
  %1143 = vmatprep.subr.mxu0 0.0
  %1144 = vmatpush1.msra.mxu0 0.0
  %1145 = vmatprep.subr.mxu0 0.0
  %1146 = vmatpush1.msra.mxu0 0.0
  %1147 = vmatprep.subr.mxu0 0.0
  %1148 = vmatpush1.msra.mxu0 0.0
  %1149 = vmatprep.mubr.f32.mxu0 0.0
  %1150 = vmatmul.mubr.f32.gmra.mrb[0].mxu0 %v1080
  %v1151 = vpop.f32.mrb[0].mxu0
  %v1152 = vadd.f32 0.0, %v1151
  %v1153 = vpop.f32.mrb[0].mxu0
  %1154 = vmatprep.mubr.f32.mxu0 0.0
  %1155 = vmatmul.mubr.f32.gmra.mrb[0].mxu0 %v1083
  %v1156 = vpop.f32.mrb[0].mxu0
  %v1157 = vadd.f32 0.0, %v1156
  %v1158 = vpop.f32.mrb[0].mxu0
  %1159 = vdwg.mxu0
  %v1160 = vmul.f32 %v1069, %v1152
  %v1161 = vmul.f32 %v1074, %v1157
  %1162 = vmatprep.subr.mxu0 0.0
  %1163 = vmatpush1.xpose.msra.mxu0 %v1160
  %1164 = vmatprep.subr.mxu0 0.0
  %1165 = vmatpush1.xpose.msra.mxu0 %v1161
  %1166 = vmatprep.subr.mxu0 0.0
  %1167 = vmatpush1.xpose.msra.mxu0 0.0
  %1168 = vmatprep.subr.mxu0 0.0
  %1169 = vmatpush1.xpose.msra.mxu0 0.0
  %1170 = vmatprep.subr.mxu0 0.0
  %1171 = vmatpush1.xpose.msra.mxu0 0.0
  %1172 = vmatprep.subr.mxu0 0.0
  %1173 = vmatpush1.xpose.msra.mxu0 0.0
  %1174 = vmatprep.subr.mxu0 0.0
  %1175 = vmatpush1.xpose.msra.mxu0 0.0
  %1176 = vmatprep.subr.mxu0 0.0
  %1177 = vmatpush1.xpose.msra.mxu0 0.0
  %1178 = vmatprep.subr.mxu0 0.0
  %1179 = vmatpush1.xpose.msra.mxu0 0.0
  %1180 = vmatprep.subr.mxu0 0.0
  %1181 = vmatpush1.xpose.msra.mxu0 0.0
  %1182 = vmatprep.subr.mxu0 0.0
  %1183 = vmatpush1.xpose.msra.mxu0 0.0
  %1184 = vmatprep.subr.mxu0 0.0
  %1185 = vmatpush1.xpose.msra.mxu0 0.0
  %1186 = vmatprep.subr.mxu0 0.0
  %1187 = vmatpush1.xpose.msra.mxu0 0.0
  %1188 = vmatprep.subr.mxu0 0.0
  %1189 = vmatpush1.xpose.msra.mxu0 0.0
  %1190 = vmatprep.subr.mxu0 0.0
  %1191 = vmatpush1.xpose.msra.mxu0 0.0
  %1192 = vmatprep.subr.mxu0 0.0
  %1193 = vmatpush1.xpose.msra.mxu0 0.0
  %1194 = vmatprep.subr.mxu0 0.0
  %1195 = vmatpush1.xpose.msra.mxu0 0.0
  %1196 = vmatprep.subr.mxu0 0.0
  %1197 = vmatpush1.xpose.msra.mxu0 0.0
  %1198 = vmatprep.subr.mxu0 0.0
  %1199 = vmatpush1.xpose.msra.mxu0 0.0
  %1200 = vmatprep.subr.mxu0 0.0
  %1201 = vmatpush1.xpose.msra.mxu0 0.0
  %1202 = vmatprep.subr.mxu0 0.0
  %1203 = vmatpush1.xpose.msra.mxu0 0.0
  %1204 = vmatprep.subr.mxu0 0.0
  %1205 = vmatpush1.xpose.msra.mxu0 0.0
  %1206 = vmatprep.subr.mxu0 0.0
  %1207 = vmatpush1.xpose.msra.mxu0 0.0
  %1208 = vmatprep.subr.mxu0 0.0
  %1209 = vmatpush1.xpose.msra.mxu0 0.0
  %1210 = vmatprep.subr.mxu0 0.0
  %1211 = vmatpush1.xpose.msra.mxu0 0.0
  %1212 = vmatprep.subr.mxu0 0.0
  %1213 = vmatpush1.xpose.msra.mxu0 0.0
  %1214 = vmatprep.subr.mxu0 0.0
  %1215 = vmatpush1.xpose.msra.mxu0 0.0
  %1216 = vmatprep.subr.mxu0 0.0
  %1217 = vmatpush1.xpose.msra.mxu0 0.0
  %1218 = vmatprep.subr.mxu0 0.0
  %1219 = vmatpush1.xpose.msra.mxu0 0.0
  %1220 = vmatprep.subr.mxu0 0.0
  %1221 = vmatpush1.xpose.msra.mxu0 0.0
  %1222 = vmatprep.subr.mxu0 0.0
  %1223 = vmatpush1.xpose.msra.mxu0 0.0
  %1224 = vmatprep.subr.mxu0 0.0
  %1225 = vmatpush1.xpose.msra.mxu0 0.0
  %1226 = vmatprep.mubr.f32.mxu0 0.0
  %1227 = vmatmul.mubr.f32.gmra.mrb[0].mxu0 1.0
  %v1228 = vpop.f32.mrb[0].mxu0
  %v1229 = vadd.f32 0.0, %v1228
  %v1230 = vpop.f32.mrb[0].mxu0
  %1231 = vdwg.mxu0
  %1232 = vst.msk [vmem:[%s8] sm:$0xff] %vm68, %v1229
  // Predicated region
  $region34: #{forward.1} parent=0 // pred_check
    _
  $region35: #{forward.1} parent=0 // pred_check_branch
    %1234 = sbr.rel (0) target = $region37
  $region36: #{forward.1} parent=0 // pred_region
    _
  $region37: #{forward.1} parent=0 // pred_fallthru
    _
  // Predicated region
  $region38: #{forward.1} parent=0 // pred_check
    _
  $region39: #{forward.1} parent=0 // pred_check_branch
    %1236 = sbr.rel (0) target = $region41
  $region40: #{forward.1} parent=0 // pred_region
    _
  $region41: #{forward.1} parent=0 // pred_fallthru
    _

</llo_original>
